<compile_context>
chip_gen: v7x
topology: tpu7x:2x2x1
jax: 0.10.0
libtpu: 0.0.40
codegen_flags: <defaults>
</compile_context>

<pallas_src>
import functools

import jax
import jax.numpy as jnp
import numpy as np
from jax.experimental import pallas as pl
from jax.experimental.pallas import tpu as pltpu


def _cost_volume_kernel(left_ref, right_ref, out_ref, rolled_ref, *, tile_d, channels):
    # left_ref / right_ref : (1, C, tile_h, W)  VMEM tiles (resident across the D axis)
    # out_ref              : (1, tile_d, tile_h, W)
    # rolled_ref           : (C, tile_h, W) scratch = right rolled by the block-base disparity d0
    _, _, tile_h, w = out_ref.shape
    dt = pl.program_id(2)
    d0 = dt * tile_d  # base disparity of this output block (dynamic scalar)

    # Maintain rolled_ref == roll(right, d0) along W using only static shifts:
    #   dt == 0 : copy right into the scratch,
    #   dt  > 0 : advance the previous scratch by a static tile_d.
    @pl.when(dt == 0)
    def _init_rolled():
        for ch in range(channels):
            rolled_ref[ch] = right_ref[0, ch]

    @pl.when(dt > 0)
    def _advance_rolled():
        for ch in range(channels):
            rolled_ref[ch] = pltpu.roll(rolled_ref[ch], shift=tile_d, axis=1)

    # Lane index along W, used to zero the invalid columns (w < d).
    lane = jax.lax.broadcasted_iota(jnp.int32, (tile_h, w), 1)

    for j in range(tile_d):  # small static unroll (disparities within this block)
        acc = jnp.zeros((tile_h, w), jnp.float32)
        for ch in range(channels):
            # Static-shift roll of a single (tile_h, W) channel slice (XLU slot);
            # never materializes a full (C, tile_h, W) rolled copy.
            shifted = rolled_ref[ch] if j == 0 else pltpu.roll(rolled_ref[ch], shift=j, axis=1)
            acc = acc + (left_ref[0, ch] * shifted).astype(jnp.float32)
        d = d0 + j
        out_ref[0, j] = jnp.where(lane >= d, acc, 0.0).astype(out_ref.dtype)


def _vmem_budget_bytes():
    """(tile-sizing budget, vmem_limit_bytes), derived from the actual TPU generation."""
    capacity = 64 * 1024 * 1024  # conservative fallback (v7x-sized)
    try:
        capacity = int(pltpu.get_tpu_info().vmem_capacity_bytes)
    except Exception:
        pass
    return capacity // 2, (capacity * 3) // 4


def _pick_tile_d(max_disparity, max_tile=16):
    """Largest divisor of D that is <= max_tile (caps the output block size)."""
    for td in range(min(max_disparity, max_tile), 0, -1):
        if max_disparity % td == 0:
            return td
    return 1


def _pick_tile_h(n, h, w, c, tile_d, itemsize, budget_bytes):
    """Largest valid H tile whose working set fits the per-generation VMEM budget."""
    cands = [th for th in range(h, 0, -1) if h % th == 0 and (th % 8 == 0 or th == h)]
    if n == 1:
        # Prefer >= 2 parallel tiles so both v7x TensorCores get work.
        split = [th for th in cands if h // th >= 2]
        if split:
            cands = split
    for th in cands:  # largest first
        need = th * w * (
            itemsize * (4 * c          # 2 inputs x 2 pipeline buffers
                        + c            # rolled-right scratch
                        + 2 * tile_d)  # output block x 2 pipeline buffers
            + 8                        # f32 accumulator + mask/temporaries slack
        )
        if need <= budget_bytes:
            return th
    return cands[-1]


def inner_product_cost(left, right, max_disparity, *,
                       tile_h=None, tile_d=None, pad_w_multiple=None):
    """Inner-product cost volume. dtype (f32 or bf16) is end-to-end; accumulation is f32."""
    assert left.shape == right.shape, "left/right shape mismatch"
    assert left.dtype == right.dtype, "left/right dtype mismatch"
    n, c, h, w = left.shape
    out_dtype = left.dtype
    w_orig = w

    # Optional lane-dense store path: pad W to a multiple of 128 (padded columns never
    # contaminate valid outputs because roll only wraps into the masked / sliced region).
    if pad_w_multiple is not None and w % pad_w_multiple != 0:
        wp = int(pl.cdiv(w, pad_w_multiple)) * pad_w_multiple
        pad = ((0, 0), (0, 0), (0, 0), (0, wp - w))
        left = jnp.pad(left, pad)
        right = jnp.pad(right, pad)
        w = wp

    if tile_d is None:
        tile_d = _pick_tile_d(max_disparity)
    assert max_disparity % tile_d == 0, "tile_d must divide max_disparity"

    budget_bytes, vmem_limit_bytes = _vmem_budget_bytes()
    itemsize = jnp.dtype(left.dtype).itemsize
    if tile_h is None:
        tile_h = _pick_tile_h(n, h, w, c, tile_d, itemsize, budget_bytes)
    assert h % tile_h == 0 and (tile_h % 8 == 0 or tile_h == h), "invalid tile_h"

    kernel = functools.partial(_cost_volume_kernel, tile_d=tile_d, channels=c)
    grid = (n, h // tile_h, max_disparity // tile_d)

    volume = pl.pallas_call(
        kernel,
        out_shape=jax.ShapeDtypeStruct((n, max_disparity, h, w), out_dtype),
        grid=grid,
        in_specs=[
            # index_maps ignore the disparity axis -> inputs stay resident (no re-DMA).
            pl.BlockSpec((1, c, tile_h, w), lambda b, i, dt: (b, 0, i, 0)),
            pl.BlockSpec((1, c, tile_h, w), lambda b, i, dt: (b, 0, i, 0)),
        ],
        out_specs=pl.BlockSpec((1, tile_d, tile_h, w), lambda b, i, dt: (b, dt, i, 0)),
        scratch_shapes=[pltpu.VMEM((c, tile_h, w), left.dtype)],  # carried rolled-right
        compiler_params=pltpu.CompilerParams(
            dimension_semantics=("parallel", "parallel", "arbitrary"),
            vmem_limit_bytes=int(vmem_limit_bytes),
        ),
    )(left, right)

    if w != w_orig:
        volume = volume[..., :w_orig]
    return volume


def reference_cost(left, right, max_disparity):
    """Pure-JAX reference mirroring the PyTorch loop."""
    n, c, h, w = left.shape
    vol = jnp.zeros((n, max_disparity, h, w), dtype=left.dtype)
    for i in range(max_disparity):
        if i == 0:
            vol = vol.at[:, 0, :, :].set(jnp.sum(left * right, axis=1))
        else:
            vol = vol.at[:, i, :, i:].set(
                jnp.sum(left[:, :, :, i:] * right[:, :, :, :-i], axis=1)
            )
    return vol


if __name__ == "__main__":
    key = jax.random.PRNGKey(0)
    k1, k2 = jax.random.split(key)

    N, C, H, W = 2, 4, 16, 16
    MAX_DISPARITY = 8

    left = jax.random.normal(k1, (N, C, H, W), dtype=jnp.float32)
    right = jax.random.normal(k2, (N, C, H, W), dtype=jnp.float32)

    ref = reference_cost(left, right, MAX_DISPARITY)

    # 1) Default f32 path (strict parity with the PyTorch reference).
    out = jax.block_until_ready(inner_product_cost(left, right, MAX_DISPARITY))
    np.testing.assert_allclose(np.asarray(out), np.asarray(ref), rtol=1e-5, atol=1e-5)

    # 2) Multi-disparity-tile path: exercises the carried rolled-right scratch across the
    #    "arbitrary" grid axis and small H tiles (grid = (2, 2, 2)).
    out_dt = jax.block_until_ready(
        inner_product_cost(left, right, MAX_DISPARITY, tile_h=8, tile_d=4)
    )
    np.testing.assert_allclose(np.asarray(out_dt), np.asarray(ref), rtol=1e-5, atol=1e-5)

    # 3) Lane-dense store path (W padded to a multiple of 128, then sliced back).
    out_pad = jax.block_until_ready(
        inner_product_cost(left, right, MAX_DISPARITY, pad_w_multiple=128)
    )
    np.testing.assert_allclose(np.asarray(out_pad), np.asarray(ref), rtol=1e-5, atol=1e-5)

    # 4) End-to-end bf16 storage/compute (recommended on v6e / v7x), f32 accumulation.
    #    Numerics differ from the f32 reference (documented); compared against a reference
    #    built from the bf16-rounded inputs with a coarse tolerance.
    lb, rb = left.astype(jnp.bfloat16), right.astype(jnp.bfloat16)
    ref_bf = reference_cost(lb.astype(jnp.float32), rb.astype(jnp.float32), MAX_DISPARITY)
    out_bf = jax.block_until_ready(inner_product_cost(lb, rb, MAX_DISPARITY))
    np.testing.assert_allclose(
        np.asarray(out_bf.astype(jnp.float32)), np.asarray(ref_bf), rtol=5e-2, atol=2e-1
    )

    print("KERNEL_OK")
</pallas_src>

<mosaic_0001>
module attributes {stable_mosaic.version = 11 : i64} {
  func.func @_cost_volume_kernel(%arg0: i32, %arg1: i32, %arg2: i32, %arg3: memref<1x4x16x16xf32, #tpu.memory_space<vmem>>, %arg4: memref<1x4x16x16xf32, #tpu.memory_space<vmem>>, %arg5: memref<1x8x16x16xf32, #tpu.memory_space<vmem>>, %arg6: memref<4x16x16xf32, #tpu.memory_space<vmem>>) attributes {dimension_semantics = [#tpu.dimension_semantics<parallel>, #tpu.dimension_semantics<parallel>, #tpu.dimension_semantics<arbitrary>], iteration_bounds = array<i64: 2, 1, 1>, scalar_prefetch = 0 : i64, scratch_operands = 1 : i64, tpu.core_type = #tpu.core_type<tc>, window_params = [{transform_indices = @transform_0, window_bounds = array<i64: 1, 4, 16, 16>}, {transform_indices = @transform_1, window_bounds = array<i64: 1, 4, 16, 16>}, {transform_indices = @transform_2, window_bounds = array<i64: 1, 8, 16, 16>}]} {
    %c8_i32 = arith.constant 8 : i32
    %0 = arith.muli %arg2, %c8_i32 : i32
    %c0_i32 = arith.constant 0 : i32
    %1 = arith.cmpi eq, %arg2, %c0_i32 : i32
    %2 = arith.extui %1 : i1 to i32
    %c0_i32_0 = arith.constant 0 : i32
    %3 = arith.cmpi ne, %2, %c0_i32_0 : i32
    scf.if %3 {
      %c0_295 = arith.constant 0 : index
      %c0_296 = arith.constant 0 : index
      %c0_297 = arith.constant 0 : index
      %c0_298 = arith.constant 0 : index
      %300 = vector.load %arg4[%c0_295, %c0_296, %c0_297, %c0_298] : memref<1x4x16x16xf32, #tpu.memory_space<vmem>>, vector<1x1x16x16xf32>
      %301 = vector.shape_cast %300 : vector<1x1x16x16xf32> to vector<16x16xf32>
      %c0_299 = arith.constant 0 : index
      %c0_300 = arith.constant 0 : index
      %c0_301 = arith.constant 0 : index
      %302 = vector.load %arg6[%c0_299, %c0_300, %c0_301] : memref<4x16x16xf32, #tpu.memory_space<vmem>>, vector<1x16x16xf32>
      %303 = vector.shape_cast %302 : vector<1x16x16xf32> to vector<16x16xf32>
      %304 = vector.shape_cast %301 : vector<16x16xf32> to vector<1x16x16xf32>
      tpu.vector_store %arg6[%c0_299, %c0_300, %c0_301], %304 {strides = array<i32>} : memref<4x16x16xf32, #tpu.memory_space<vmem>>, vector<1x16x16xf32>,
      %c0_302 = arith.constant 0 : index
      %c1_303 = arith.constant 1 : index
      %c0_304 = arith.constant 0 : index
      %c0_305 = arith.constant 0 : index
      %305 = vector.load %arg4[%c0_302, %c1_303, %c0_304, %c0_305] : memref<1x4x16x16xf32, #tpu.memory_space<vmem>>, vector<1x1x16x16xf32>
      %306 = vector.shape_cast %305 : vector<1x1x16x16xf32> to vector<16x16xf32>
      %c1_306 = arith.constant 1 : index
      %c0_307 = arith.constant 0 : index
      %c0_308 = arith.constant 0 : index
      %307 = vector.load %arg6[%c1_306, %c0_307, %c0_308] : memref<4x16x16xf32, #tpu.memory_space<vmem>>, vector<1x16x16xf32>
      %308 = vector.shape_cast %307 : vector<1x16x16xf32> to vector<16x16xf32>
      %309 = vector.shape_cast %306 : vector<16x16xf32> to vector<1x16x16xf32>
      tpu.vector_store %arg6[%c1_306, %c0_307, %c0_308], %309 {strides = array<i32>} : memref<4x16x16xf32, #tpu.memory_space<vmem>>, vector<1x16x16xf32>,
      %c0_309 = arith.constant 0 : index
      %c2_310 = arith.constant 2 : index
      %c0_311 = arith.constant 0 : index
      %c0_312 = arith.constant 0 : index
      %310 = vector.load %arg4[%c0_309, %c2_310, %c0_311, %c0_312] : memref<1x4x16x16xf32, #tpu.memory_space<vmem>>, vector<1x1x16x16xf32>
      %311 = vector.shape_cast %310 : vector<1x1x16x16xf32> to vector<16x16xf32>
      %c2_313 = arith.constant 2 : index
      %c0_314 = arith.constant 0 : index
      %c0_315 = arith.constant 0 : index
      %312 = vector.load %arg6[%c2_313, %c0_314, %c0_315] : memref<4x16x16xf32, #tpu.memory_space<vmem>>, vector<1x16x16xf32>
      %313 = vector.shape_cast %312 : vector<1x16x16xf32> to vector<16x16xf32>
      %314 = vector.shape_cast %311 : vector<16x16xf32> to vector<1x16x16xf32>
      tpu.vector_store %arg6[%c2_313, %c0_314, %c0_315], %314 {strides = array<i32>} : memref<4x16x16xf32, #tpu.memory_space<vmem>>, vector<1x16x16xf32>,
      %c0_316 = arith.constant 0 : index
      %c3_317 = arith.constant 3 : index
      %c0_318 = arith.constant 0 : index
      %c0_319 = arith.constant 0 : index
      %315 = vector.load %arg4[%c0_316, %c3_317, %c0_318, %c0_319] : memref<1x4x16x16xf32, #tpu.memory_space<vmem>>, vector<1x1x16x16xf32>
      %316 = vector.shape_cast %315 : vector<1x1x16x16xf32> to vector<16x16xf32>
      %c3_320 = arith.constant 3 : index
      %c0_321 = arith.constant 0 : index
      %c0_322 = arith.constant 0 : index
      %317 = vector.load %arg6[%c3_320, %c0_321, %c0_322] : memref<4x16x16xf32, #tpu.memory_space<vmem>>, vector<1x16x16xf32>
      %318 = vector.shape_cast %317 : vector<1x16x16xf32> to vector<16x16xf32>
      %319 = vector.shape_cast %316 : vector<16x16xf32> to vector<1x16x16xf32>
      tpu.vector_store %arg6[%c3_320, %c0_321, %c0_322], %319 {strides = array<i32>} : memref<4x16x16xf32, #tpu.memory_space<vmem>>, vector<1x16x16xf32>,
    } else {
    }
    %c0_i32_1 = arith.constant 0 : i32
    %4 = arith.cmpi sgt, %arg2, %c0_i32_1 : i32
    %5 = arith.extui %4 : i1 to i32
    %c0_i32_2 = arith.constant 0 : i32
    %6 = arith.cmpi ne, %5, %c0_i32_2 : i32
    scf.if %6 {
      %c0_295 = arith.constant 0 : index
      %c0_296 = arith.constant 0 : index
      %c0_297 = arith.constant 0 : index
      %300 = vector.load %arg6[%c0_295, %c0_296, %c0_297] : memref<4x16x16xf32, #tpu.memory_space<vmem>>, vector<1x16x16xf32>
      %301 = vector.shape_cast %300 : vector<1x16x16xf32> to vector<16x16xf32>
      %c8_i32_298 = arith.constant 8 : i32
      %302 = tpu.dynamic_rotate %301 by %c8_i32_298 dim 1 : vector<16x16xf32>, i32 -> vector<16x16xf32>
      %c0_299 = arith.constant 0 : index
      %c0_300 = arith.constant 0 : index
      %c0_301 = arith.constant 0 : index
      %303 = vector.load %arg6[%c0_299, %c0_300, %c0_301] : memref<4x16x16xf32, #tpu.memory_space<vmem>>, vector<1x16x16xf32>
      %304 = vector.shape_cast %303 : vector<1x16x16xf32> to vector<16x16xf32>
      %305 = vector.shape_cast %302 : vector<16x16xf32> to vector<1x16x16xf32>
      tpu.vector_store %arg6[%c0_299, %c0_300, %c0_301], %305 {strides = array<i32>} : memref<4x16x16xf32, #tpu.memory_space<vmem>>, vector<1x16x16xf32>,
      %c1_302 = arith.constant 1 : index
      %c0_303 = arith.constant 0 : index
      %c0_304 = arith.constant 0 : index
      %306 = vector.load %arg6[%c1_302, %c0_303, %c0_304] : memref<4x16x16xf32, #tpu.memory_space<vmem>>, vector<1x16x16xf32>
      %307 = vector.shape_cast %306 : vector<1x16x16xf32> to vector<16x16xf32>
      %c8_i32_305 = arith.constant 8 : i32
      %308 = tpu.dynamic_rotate %307 by %c8_i32_305 dim 1 : vector<16x16xf32>, i32 -> vector<16x16xf32>
      %c1_306 = arith.constant 1 : index
      %c0_307 = arith.constant 0 : index
      %c0_308 = arith.constant 0 : index
      %309 = vector.load %arg6[%c1_306, %c0_307, %c0_308] : memref<4x16x16xf32, #tpu.memory_space<vmem>>, vector<1x16x16xf32>
      %310 = vector.shape_cast %309 : vector<1x16x16xf32> to vector<16x16xf32>
      %311 = vector.shape_cast %308 : vector<16x16xf32> to vector<1x16x16xf32>
      tpu.vector_store %arg6[%c1_306, %c0_307, %c0_308], %311 {strides = array<i32>} : memref<4x16x16xf32, #tpu.memory_space<vmem>>, vector<1x16x16xf32>,
      %c2_309 = arith.constant 2 : index
      %c0_310 = arith.constant 0 : index
      %c0_311 = arith.constant 0 : index
      %312 = vector.load %arg6[%c2_309, %c0_310, %c0_311] : memref<4x16x16xf32, #tpu.memory_space<vmem>>, vector<1x16x16xf32>
      %313 = vector.shape_cast %312 : vector<1x16x16xf32> to vector<16x16xf32>
      %c8_i32_312 = arith.constant 8 : i32
      %314 = tpu.dynamic_rotate %313 by %c8_i32_312 dim 1 : vector<16x16xf32>, i32 -> vector<16x16xf32>
      %c2_313 = arith.constant 2 : index
      %c0_314 = arith.constant 0 : index
      %c0_315 = arith.constant 0 : index
      %315 = vector.load %arg6[%c2_313, %c0_314, %c0_315] : memref<4x16x16xf32, #tpu.memory_space<vmem>>, vector<1x16x16xf32>
      %316 = vector.shape_cast %315 : vector<1x16x16xf32> to vector<16x16xf32>
      %317 = vector.shape_cast %314 : vector<16x16xf32> to vector<1x16x16xf32>
      tpu.vector_store %arg6[%c2_313, %c0_314, %c0_315], %317 {strides = array<i32>} : memref<4x16x16xf32, #tpu.memory_space<vmem>>, vector<1x16x16xf32>,
      %c3_316 = arith.constant 3 : index
      %c0_317 = arith.constant 0 : index
      %c0_318 = arith.constant 0 : index
      %318 = vector.load %arg6[%c3_316, %c0_317, %c0_318] : memref<4x16x16xf32, #tpu.memory_space<vmem>>, vector<1x16x16xf32>
      %319 = vector.shape_cast %318 : vector<1x16x16xf32> to vector<16x16xf32>
      %c8_i32_319 = arith.constant 8 : i32
      %320 = tpu.dynamic_rotate %319 by %c8_i32_319 dim 1 : vector<16x16xf32>, i32 -> vector<16x16xf32>
      %c3_320 = arith.constant 3 : index
      %c0_321 = arith.constant 0 : index
      %c0_322 = arith.constant 0 : index
      %321 = vector.load %arg6[%c3_320, %c0_321, %c0_322] : memref<4x16x16xf32, #tpu.memory_space<vmem>>, vector<1x16x16xf32>
      %322 = vector.shape_cast %321 : vector<1x16x16xf32> to vector<16x16xf32>
      %323 = vector.shape_cast %320 : vector<16x16xf32> to vector<1x16x16xf32>
      tpu.vector_store %arg6[%c3_320, %c0_321, %c0_322], %323 {strides = array<i32>} : memref<4x16x16xf32, #tpu.memory_space<vmem>>, vector<1x16x16xf32>,
    } else {
    }
    %7 = tpu.iota {dimensions = array<i32: 1>} : vector<16x16xi32>
    %cst = arith.constant 0.000000e+00 : f32
    %8 = vector.broadcast %cst : f32 to vector<16x16xf32>
    %c0 = arith.constant 0 : index
    %c0_3 = arith.constant 0 : index
    %c0_4 = arith.constant 0 : index
    %9 = vector.load %arg6[%c0, %c0_3, %c0_4] : memref<4x16x16xf32, #tpu.memory_space<vmem>>, vector<1x16x16xf32>
    %10 = vector.shape_cast %9 : vector<1x16x16xf32> to vector<16x16xf32>
    %c0_5 = arith.constant 0 : index
    %c0_6 = arith.constant 0 : index
    %c0_7 = arith.constant 0 : index
    %c0_8 = arith.constant 0 : index
    %11 = vector.load %arg3[%c0_5, %c0_6, %c0_7, %c0_8] : memref<1x4x16x16xf32, #tpu.memory_space<vmem>>, vector<1x1x16x16xf32>
    %12 = vector.shape_cast %11 : vector<1x1x16x16xf32> to vector<16x16xf32>
    %13 = arith.mulf %12, %10 : vector<16x16xf32>
    %14 = arith.addf %8, %13 : vector<16x16xf32>
    %c1 = arith.constant 1 : index
    %c0_9 = arith.constant 0 : index
    %c0_10 = arith.constant 0 : index
    %15 = vector.load %arg6[%c1, %c0_9, %c0_10] : memref<4x16x16xf32, #tpu.memory_space<vmem>>, vector<1x16x16xf32>
    %16 = vector.shape_cast %15 : vector<1x16x16xf32> to vector<16x16xf32>
    %c0_11 = arith.constant 0 : index
    %c1_12 = arith.constant 1 : index
    %c0_13 = arith.constant 0 : index
    %c0_14 = arith.constant 0 : index
    %17 = vector.load %arg3[%c0_11, %c1_12, %c0_13, %c0_14] : memref<1x4x16x16xf32, #tpu.memory_space<vmem>>, vector<1x1x16x16xf32>
    %18 = vector.shape_cast %17 : vector<1x1x16x16xf32> to vector<16x16xf32>
    %19 = arith.mulf %18, %16 : vector<16x16xf32>
    %20 = arith.addf %14, %19 : vector<16x16xf32>
    %c2 = arith.constant 2 : index
    %c0_15 = arith.constant 0 : index
    %c0_16 = arith.constant 0 : index
    %21 = vector.load %arg6[%c2, %c0_15, %c0_16] : memref<4x16x16xf32, #tpu.memory_space<vmem>>, vector<1x16x16xf32>
    %22 = vector.shape_cast %21 : vector<1x16x16xf32> to vector<16x16xf32>
    %c0_17 = arith.constant 0 : index
    %c2_18 = arith.constant 2 : index
    %c0_19 = arith.constant 0 : index
    %c0_20 = arith.constant 0 : index
    %23 = vector.load %arg3[%c0_17, %c2_18, %c0_19, %c0_20] : memref<1x4x16x16xf32, #tpu.memory_space<vmem>>, vector<1x1x16x16xf32>
    %24 = vector.shape_cast %23 : vector<1x1x16x16xf32> to vector<16x16xf32>
    %25 = arith.mulf %24, %22 : vector<16x16xf32>
    %26 = arith.addf %20, %25 : vector<16x16xf32>
    %c3 = arith.constant 3 : index
    %c0_21 = arith.constant 0 : index
    %c0_22 = arith.constant 0 : index
    %27 = vector.load %arg6[%c3, %c0_21, %c0_22] : memref<4x16x16xf32, #tpu.memory_space<vmem>>, vector<1x16x16xf32>
    %28 = vector.shape_cast %27 : vector<1x16x16xf32> to vector<16x16xf32>
    %c0_23 = arith.constant 0 : index
    %c3_24 = arith.constant 3 : index
    %c0_25 = arith.constant 0 : index
    %c0_26 = arith.constant 0 : index
    %29 = vector.load %arg3[%c0_23, %c3_24, %c0_25, %c0_26] : memref<1x4x16x16xf32, #tpu.memory_space<vmem>>, vector<1x1x16x16xf32>
    %30 = vector.shape_cast %29 : vector<1x1x16x16xf32> to vector<16x16xf32>
    %31 = arith.mulf %30, %28 : vector<16x16xf32>
    %32 = arith.addf %26, %31 : vector<16x16xf32>
    %c0_i32_27 = arith.constant 0 : i32
    %33 = arith.addi %0, %c0_i32_27 : i32
    %34 = vector.broadcast %33 : i32 to vector<16x16xi32>
    %35 = arith.cmpi sge, %7, %34 : vector<16x16xi32>
    %cst_28 = arith.constant 0.000000e+00 : f32
    %36 = vector.broadcast %cst_28 : f32 to vector<16x16xf32>
    %37 = arith.select %35, %32, %36 : vector<16x16xi1>, vector<16x16xf32>
    %c0_29 = arith.constant 0 : index
    %c0_30 = arith.constant 0 : index
    %c0_31 = arith.constant 0 : index
    %c0_32 = arith.constant 0 : index
    %38 = vector.load %arg5[%c0_29, %c0_30, %c0_31, %c0_32] : memref<1x8x16x16xf32, #tpu.memory_space<vmem>>, vector<1x1x16x16xf32>
    %39 = vector.shape_cast %38 : vector<1x1x16x16xf32> to vector<16x16xf32>
    %40 = vector.shape_cast %37 : vector<16x16xf32> to vector<1x1x16x16xf32>
    tpu.vector_store %arg5[%c0_29, %c0_30, %c0_31, %c0_32], %40 {strides = array<i32>} : memref<1x8x16x16xf32, #tpu.memory_space<vmem>>, vector<1x1x16x16xf32>,
    %cst_33 = arith.constant 0.000000e+00 : f32
    %41 = vector.broadcast %cst_33 : f32 to vector<16x16xf32>
    %c0_34 = arith.constant 0 : index
    %c0_35 = arith.constant 0 : index
    %c0_36 = arith.constant 0 : index
    %42 = vector.load %arg6[%c0_34, %c0_35, %c0_36] : memref<4x16x16xf32, #tpu.memory_space<vmem>>, vector<1x16x16xf32>
    %43 = vector.shape_cast %42 : vector<1x16x16xf32> to vector<16x16xf32>
    %c1_i32 = arith.constant 1 : i32
    %44 = tpu.dynamic_rotate %43 by %c1_i32 dim 1 : vector<16x16xf32>, i32 -> vector<16x16xf32>
    %c0_37 = arith.constant 0 : index
    %c0_38 = arith.constant 0 : index
    %c0_39 = arith.constant 0 : index
    %c0_40 = arith.constant 0 : index
    %45 = vector.load %arg3[%c0_37, %c0_38, %c0_39, %c0_40] : memref<1x4x16x16xf32, #tpu.memory_space<vmem>>, vector<1x1x16x16xf32>
    %46 = vector.shape_cast %45 : vector<1x1x16x16xf32> to vector<16x16xf32>
    %47 = arith.mulf %46, %44 : vector<16x16xf32>
    %48 = arith.addf %41, %47 : vector<16x16xf32>
    %c1_41 = arith.constant 1 : index
    %c0_42 = arith.constant 0 : index
    %c0_43 = arith.constant 0 : index
    %49 = vector.load %arg6[%c1_41, %c0_42, %c0_43] : memref<4x16x16xf32, #tpu.memory_space<vmem>>, vector<1x16x16xf32>
    %50 = vector.shape_cast %49 : vector<1x16x16xf32> to vector<16x16xf32>
    %c1_i32_44 = arith.constant 1 : i32
    %51 = tpu.dynamic_rotate %50 by %c1_i32_44 dim 1 : vector<16x16xf32>, i32 -> vector<16x16xf32>
    %c0_45 = arith.constant 0 : index
    %c1_46 = arith.constant 1 : index
    %c0_47 = arith.constant 0 : index
    %c0_48 = arith.constant 0 : index
    %52 = vector.load %arg3[%c0_45, %c1_46, %c0_47, %c0_48] : memref<1x4x16x16xf32, #tpu.memory_space<vmem>>, vector<1x1x16x16xf32>
    %53 = vector.shape_cast %52 : vector<1x1x16x16xf32> to vector<16x16xf32>
    %54 = arith.mulf %53, %51 : vector<16x16xf32>
    %55 = arith.addf %48, %54 : vector<16x16xf32>
    %c2_49 = arith.constant 2 : index
    %c0_50 = arith.constant 0 : index
    %c0_51 = arith.constant 0 : index
    %56 = vector.load %arg6[%c2_49, %c0_50, %c0_51] : memref<4x16x16xf32, #tpu.memory_space<vmem>>, vector<1x16x16xf32>
    %57 = vector.shape_cast %56 : vector<1x16x16xf32> to vector<16x16xf32>
    %c1_i32_52 = arith.constant 1 : i32
    %58 = tpu.dynamic_rotate %57 by %c1_i32_52 dim 1 : vector<16x16xf32>, i32 -> vector<16x16xf32>
    %c0_53 = arith.constant 0 : index
    %c2_54 = arith.constant 2 : index
    %c0_55 = arith.constant 0 : index
    %c0_56 = arith.constant 0 : index
    %59 = vector.load %arg3[%c0_53, %c2_54, %c0_55, %c0_56] : memref<1x4x16x16xf32, #tpu.memory_space<vmem>>, vector<1x1x16x16xf32>
    %60 = vector.shape_cast %59 : vector<1x1x16x16xf32> to vector<16x16xf32>
    %61 = arith.mulf %60, %58 : vector<16x16xf32>
    %62 = arith.addf %55, %61 : vector<16x16xf32>
    %c3_57 = arith.constant 3 : index
    %c0_58 = arith.constant 0 : index
    %c0_59 = arith.constant 0 : index
    %63 = vector.load %arg6[%c3_57, %c0_58, %c0_59] : memref<4x16x16xf32, #tpu.memory_space<vmem>>, vector<1x16x16xf32>
    %64 = vector.shape_cast %63 : vector<1x16x16xf32> to vector<16x16xf32>
    %c1_i32_60 = arith.constant 1 : i32
    %65 = tpu.dynamic_rotate %64 by %c1_i32_60 dim 1 : vector<16x16xf32>, i32 -> vector<16x16xf32>
    %c0_61 = arith.constant 0 : index
    %c3_62 = arith.constant 3 : index
    %c0_63 = arith.constant 0 : index
    %c0_64 = arith.constant 0 : index
    %66 = vector.load %arg3[%c0_61, %c3_62, %c0_63, %c0_64] : memref<1x4x16x16xf32, #tpu.memory_space<vmem>>, vector<1x1x16x16xf32>
    %67 = vector.shape_cast %66 : vector<1x1x16x16xf32> to vector<16x16xf32>
    %68 = arith.mulf %67, %65 : vector<16x16xf32>
    %69 = arith.addf %62, %68 : vector<16x16xf32>
    %c1_i32_65 = arith.constant 1 : i32
    %70 = arith.addi %0, %c1_i32_65 : i32
    %71 = vector.broadcast %70 : i32 to vector<16x16xi32>
    %72 = arith.cmpi sge, %7, %71 : vector<16x16xi32>
    %cst_66 = arith.constant 0.000000e+00 : f32
    %73 = vector.broadcast %cst_66 : f32 to vector<16x16xf32>
    %74 = arith.select %72, %69, %73 : vector<16x16xi1>, vector<16x16xf32>
    %c0_67 = arith.constant 0 : index
    %c1_68 = arith.constant 1 : index
    %c0_69 = arith.constant 0 : index
    %c0_70 = arith.constant 0 : index
    %75 = vector.load %arg5[%c0_67, %c1_68, %c0_69, %c0_70] : memref<1x8x16x16xf32, #tpu.memory_space<vmem>>, vector<1x1x16x16xf32>
    %76 = vector.shape_cast %75 : vector<1x1x16x16xf32> to vector<16x16xf32>
    %77 = vector.shape_cast %74 : vector<16x16xf32> to vector<1x1x16x16xf32>
    tpu.vector_store %arg5[%c0_67, %c1_68, %c0_69, %c0_70], %77 {strides = array<i32>} : memref<1x8x16x16xf32, #tpu.memory_space<vmem>>, vector<1x1x16x16xf32>,
    %cst_71 = arith.constant 0.000000e+00 : f32
    %78 = vector.broadcast %cst_71 : f32 to vector<16x16xf32>
    %c0_72 = arith.constant 0 : index
    %c0_73 = arith.constant 0 : index
    %c0_74 = arith.constant 0 : index
    %79 = vector.load %arg6[%c0_72, %c0_73, %c0_74] : memref<4x16x16xf32, #tpu.memory_space<vmem>>, vector<1x16x16xf32>
    %80 = vector.shape_cast %79 : vector<1x16x16xf32> to vector<16x16xf32>
    %c2_i32 = arith.constant 2 : i32
    %81 = tpu.dynamic_rotate %80 by %c2_i32 dim 1 : vector<16x16xf32>, i32 -> vector<16x16xf32>
    %c0_75 = arith.constant 0 : index
    %c0_76 = arith.constant 0 : index
    %c0_77 = arith.constant 0 : index
    %c0_78 = arith.constant 0 : index
    %82 = vector.load %arg3[%c0_75, %c0_76, %c0_77, %c0_78] : memref<1x4x16x16xf32, #tpu.memory_space<vmem>>, vector<1x1x16x16xf32>
    %83 = vector.shape_cast %82 : vector<1x1x16x16xf32> to vector<16x16xf32>
    %84 = arith.mulf %83, %81 : vector<16x16xf32>
    %85 = arith.addf %78, %84 : vector<16x16xf32>
    %c1_79 = arith.constant 1 : index
    %c0_80 = arith.constant 0 : index
    %c0_81 = arith.constant 0 : index
    %86 = vector.load %arg6[%c1_79, %c0_80, %c0_81] : memref<4x16x16xf32, #tpu.memory_space<vmem>>, vector<1x16x16xf32>
    %87 = vector.shape_cast %86 : vector<1x16x16xf32> to vector<16x16xf32>
    %c2_i32_82 = arith.constant 2 : i32
    %88 = tpu.dynamic_rotate %87 by %c2_i32_82 dim 1 : vector<16x16xf32>, i32 -> vector<16x16xf32>
    %c0_83 = arith.constant 0 : index
    %c1_84 = arith.constant 1 : index
    %c0_85 = arith.constant 0 : index
    %c0_86 = arith.constant 0 : index
    %89 = vector.load %arg3[%c0_83, %c1_84, %c0_85, %c0_86] : memref<1x4x16x16xf32, #tpu.memory_space<vmem>>, vector<1x1x16x16xf32>
    %90 = vector.shape_cast %89 : vector<1x1x16x16xf32> to vector<16x16xf32>
    %91 = arith.mulf %90, %88 : vector<16x16xf32>
    %92 = arith.addf %85, %91 : vector<16x16xf32>
    %c2_87 = arith.constant 2 : index
    %c0_88 = arith.constant 0 : index
    %c0_89 = arith.constant 0 : index
    %93 = vector.load %arg6[%c2_87, %c0_88, %c0_89] : memref<4x16x16xf32, #tpu.memory_space<vmem>>, vector<1x16x16xf32>
    %94 = vector.shape_cast %93 : vector<1x16x16xf32> to vector<16x16xf32>
    %c2_i32_90 = arith.constant 2 : i32
    %95 = tpu.dynamic_rotate %94 by %c2_i32_90 dim 1 : vector<16x16xf32>, i32 -> vector<16x16xf32>
    %c0_91 = arith.constant 0 : index
    %c2_92 = arith.constant 2 : index
    %c0_93 = arith.constant 0 : index
    %c0_94 = arith.constant 0 : index
    %96 = vector.load %arg3[%c0_91, %c2_92, %c0_93, %c0_94] : memref<1x4x16x16xf32, #tpu.memory_space<vmem>>, vector<1x1x16x16xf32>
    %97 = vector.shape_cast %96 : vector<1x1x16x16xf32> to vector<16x16xf32>
    %98 = arith.mulf %97, %95 : vector<16x16xf32>
    %99 = arith.addf %92, %98 : vector<16x16xf32>
    %c3_95 = arith.constant 3 : index
    %c0_96 = arith.constant 0 : index
    %c0_97 = arith.constant 0 : index
    %100 = vector.load %arg6[%c3_95, %c0_96, %c0_97] : memref<4x16x16xf32, #tpu.memory_space<vmem>>, vector<1x16x16xf32>
    %101 = vector.shape_cast %100 : vector<1x16x16xf32> to vector<16x16xf32>
    %c2_i32_98 = arith.constant 2 : i32
    %102 = tpu.dynamic_rotate %101 by %c2_i32_98 dim 1 : vector<16x16xf32>, i32 -> vector<16x16xf32>
    %c0_99 = arith.constant 0 : index
    %c3_100 = arith.constant 3 : index
    %c0_101 = arith.constant 0 : index
    %c0_102 = arith.constant 0 : index
    %103 = vector.load %arg3[%c0_99, %c3_100, %c0_101, %c0_102] : memref<1x4x16x16xf32, #tpu.memory_space<vmem>>, vector<1x1x16x16xf32>
    %104 = vector.shape_cast %103 : vector<1x1x16x16xf32> to vector<16x16xf32>
    %105 = arith.mulf %104, %102 : vector<16x16xf32>
    %106 = arith.addf %99, %105 : vector<16x16xf32>
    %c2_i32_103 = arith.constant 2 : i32
    %107 = arith.addi %0, %c2_i32_103 : i32
    %108 = vector.broadcast %107 : i32 to vector<16x16xi32>
    %109 = arith.cmpi sge, %7, %108 : vector<16x16xi32>
    %cst_104 = arith.constant 0.000000e+00 : f32
    %110 = vector.broadcast %cst_104 : f32 to vector<16x16xf32>
    %111 = arith.select %109, %106, %110 : vector<16x16xi1>, vector<16x16xf32>
    %c0_105 = arith.constant 0 : index
    %c2_106 = arith.constant 2 : index
    %c0_107 = arith.constant 0 : index
    %c0_108 = arith.constant 0 : index
    %112 = vector.load %arg5[%c0_105, %c2_106, %c0_107, %c0_108] : memref<1x8x16x16xf32, #tpu.memory_space<vmem>>, vector<1x1x16x16xf32>
    %113 = vector.shape_cast %112 : vector<1x1x16x16xf32> to vector<16x16xf32>
    %114 = vector.shape_cast %111 : vector<16x16xf32> to vector<1x1x16x16xf32>
    tpu.vector_store %arg5[%c0_105, %c2_106, %c0_107, %c0_108], %114 {strides = array<i32>} : memref<1x8x16x16xf32, #tpu.memory_space<vmem>>, vector<1x1x16x16xf32>,
    %cst_109 = arith.constant 0.000000e+00 : f32
    %115 = vector.broadcast %cst_109 : f32 to vector<16x16xf32>
    %c0_110 = arith.constant 0 : index
    %c0_111 = arith.constant 0 : index
    %c0_112 = arith.constant 0 : index
    %116 = vector.load %arg6[%c0_110, %c0_111, %c0_112] : memref<4x16x16xf32, #tpu.memory_space<vmem>>, vector<1x16x16xf32>
    %117 = vector.shape_cast %116 : vector<1x16x16xf32> to vector<16x16xf32>
    %c3_i32 = arith.constant 3 : i32
    %118 = tpu.dynamic_rotate %117 by %c3_i32 dim 1 : vector<16x16xf32>, i32 -> vector<16x16xf32>
    %c0_113 = arith.constant 0 : index
    %c0_114 = arith.constant 0 : index
    %c0_115 = arith.constant 0 : index
    %c0_116 = arith.constant 0 : index
    %119 = vector.load %arg3[%c0_113, %c0_114, %c0_115, %c0_116] : memref<1x4x16x16xf32, #tpu.memory_space<vmem>>, vector<1x1x16x16xf32>
    %120 = vector.shape_cast %119 : vector<1x1x16x16xf32> to vector<16x16xf32>
    %121 = arith.mulf %120, %118 : vector<16x16xf32>
    %122 = arith.addf %115, %121 : vector<16x16xf32>
    %c1_117 = arith.constant 1 : index
    %c0_118 = arith.constant 0 : index
    %c0_119 = arith.constant 0 : index
    %123 = vector.load %arg6[%c1_117, %c0_118, %c0_119] : memref<4x16x16xf32, #tpu.memory_space<vmem>>, vector<1x16x16xf32>
    %124 = vector.shape_cast %123 : vector<1x16x16xf32> to vector<16x16xf32>
    %c3_i32_120 = arith.constant 3 : i32
    %125 = tpu.dynamic_rotate %124 by %c3_i32_120 dim 1 : vector<16x16xf32>, i32 -> vector<16x16xf32>
    %c0_121 = arith.constant 0 : index
    %c1_122 = arith.constant 1 : index
    %c0_123 = arith.constant 0 : index
    %c0_124 = arith.constant 0 : index
    %126 = vector.load %arg3[%c0_121, %c1_122, %c0_123, %c0_124] : memref<1x4x16x16xf32, #tpu.memory_space<vmem>>, vector<1x1x16x16xf32>
    %127 = vector.shape_cast %126 : vector<1x1x16x16xf32> to vector<16x16xf32>
    %128 = arith.mulf %127, %125 : vector<16x16xf32>
    %129 = arith.addf %122, %128 : vector<16x16xf32>
    %c2_125 = arith.constant 2 : index
    %c0_126 = arith.constant 0 : index
    %c0_127 = arith.constant 0 : index
    %130 = vector.load %arg6[%c2_125, %c0_126, %c0_127] : memref<4x16x16xf32, #tpu.memory_space<vmem>>, vector<1x16x16xf32>
    %131 = vector.shape_cast %130 : vector<1x16x16xf32> to vector<16x16xf32>
    %c3_i32_128 = arith.constant 3 : i32
    %132 = tpu.dynamic_rotate %131 by %c3_i32_128 dim 1 : vector<16x16xf32>, i32 -> vector<16x16xf32>
    %c0_129 = arith.constant 0 : index
    %c2_130 = arith.constant 2 : index
    %c0_131 = arith.constant 0 : index
    %c0_132 = arith.constant 0 : index
    %133 = vector.load %arg3[%c0_129, %c2_130, %c0_131, %c0_132] : memref<1x4x16x16xf32, #tpu.memory_space<vmem>>, vector<1x1x16x16xf32>
    %134 = vector.shape_cast %133 : vector<1x1x16x16xf32> to vector<16x16xf32>
    %135 = arith.mulf %134, %132 : vector<16x16xf32>
    %136 = arith.addf %129, %135 : vector<16x16xf32>
    %c3_133 = arith.constant 3 : index
    %c0_134 = arith.constant 0 : index
    %c0_135 = arith.constant 0 : index
    %137 = vector.load %arg6[%c3_133, %c0_134, %c0_135] : memref<4x16x16xf32, #tpu.memory_space<vmem>>, vector<1x16x16xf32>
    %138 = vector.shape_cast %137 : vector<1x16x16xf32> to vector<16x16xf32>
    %c3_i32_136 = arith.constant 3 : i32
    %139 = tpu.dynamic_rotate %138 by %c3_i32_136 dim 1 : vector<16x16xf32>, i32 -> vector<16x16xf32>
    %c0_137 = arith.constant 0 : index
    %c3_138 = arith.constant 3 : index
    %c0_139 = arith.constant 0 : index
    %c0_140 = arith.constant 0 : index
    %140 = vector.load %arg3[%c0_137, %c3_138, %c0_139, %c0_140] : memref<1x4x16x16xf32, #tpu.memory_space<vmem>>, vector<1x1x16x16xf32>
    %141 = vector.shape_cast %140 : vector<1x1x16x16xf32> to vector<16x16xf32>
    %142 = arith.mulf %141, %139 : vector<16x16xf32>
    %143 = arith.addf %136, %142 : vector<16x16xf32>
    %c3_i32_141 = arith.constant 3 : i32
    %144 = arith.addi %0, %c3_i32_141 : i32
    %145 = vector.broadcast %144 : i32 to vector<16x16xi32>
    %146 = arith.cmpi sge, %7, %145 : vector<16x16xi32>
    %cst_142 = arith.constant 0.000000e+00 : f32
    %147 = vector.broadcast %cst_142 : f32 to vector<16x16xf32>
    %148 = arith.select %146, %143, %147 : vector<16x16xi1>, vector<16x16xf32>
    %c0_143 = arith.constant 0 : index
    %c3_144 = arith.constant 3 : index
    %c0_145 = arith.constant 0 : index
    %c0_146 = arith.constant 0 : index
    %149 = vector.load %arg5[%c0_143, %c3_144, %c0_145, %c0_146] : memref<1x8x16x16xf32, #tpu.memory_space<vmem>>, vector<1x1x16x16xf32>
    %150 = vector.shape_cast %149 : vector<1x1x16x16xf32> to vector<16x16xf32>
    %151 = vector.shape_cast %148 : vector<16x16xf32> to vector<1x1x16x16xf32>
    tpu.vector_store %arg5[%c0_143, %c3_144, %c0_145, %c0_146], %151 {strides = array<i32>} : memref<1x8x16x16xf32, #tpu.memory_space<vmem>>, vector<1x1x16x16xf32>,
    %cst_147 = arith.constant 0.000000e+00 : f32
    %152 = vector.broadcast %cst_147 : f32 to vector<16x16xf32>
    %c0_148 = arith.constant 0 : index
    %c0_149 = arith.constant 0 : index
    %c0_150 = arith.constant 0 : index
    %153 = vector.load %arg6[%c0_148, %c0_149, %c0_150] : memref<4x16x16xf32, #tpu.memory_space<vmem>>, vector<1x16x16xf32>
    %154 = vector.shape_cast %153 : vector<1x16x16xf32> to vector<16x16xf32>
    %c4_i32 = arith.constant 4 : i32
    %155 = tpu.dynamic_rotate %154 by %c4_i32 dim 1 : vector<16x16xf32>, i32 -> vector<16x16xf32>
    %c0_151 = arith.constant 0 : index
    %c0_152 = arith.constant 0 : index
    %c0_153 = arith.constant 0 : index
    %c0_154 = arith.constant 0 : index
    %156 = vector.load %arg3[%c0_151, %c0_152, %c0_153, %c0_154] : memref<1x4x16x16xf32, #tpu.memory_space<vmem>>, vector<1x1x16x16xf32>
    %157 = vector.shape_cast %156 : vector<1x1x16x16xf32> to vector<16x16xf32>
    %158 = arith.mulf %157, %155 : vector<16x16xf32>
    %159 = arith.addf %152, %158 : vector<16x16xf32>
    %c1_155 = arith.constant 1 : index
    %c0_156 = arith.constant 0 : index
    %c0_157 = arith.constant 0 : index
    %160 = vector.load %arg6[%c1_155, %c0_156, %c0_157] : memref<4x16x16xf32, #tpu.memory_space<vmem>>, vector<1x16x16xf32>
    %161 = vector.shape_cast %160 : vector<1x16x16xf32> to vector<16x16xf32>
    %c4_i32_158 = arith.constant 4 : i32
    %162 = tpu.dynamic_rotate %161 by %c4_i32_158 dim 1 : vector<16x16xf32>, i32 -> vector<16x16xf32>
    %c0_159 = arith.constant 0 : index
    %c1_160 = arith.constant 1 : index
    %c0_161 = arith.constant 0 : index
    %c0_162 = arith.constant 0 : index
    %163 = vector.load %arg3[%c0_159, %c1_160, %c0_161, %c0_162] : memref<1x4x16x16xf32, #tpu.memory_space<vmem>>, vector<1x1x16x16xf32>
    %164 = vector.shape_cast %163 : vector<1x1x16x16xf32> to vector<16x16xf32>
    %165 = arith.mulf %164, %162 : vector<16x16xf32>
    %166 = arith.addf %159, %165 : vector<16x16xf32>
    %c2_163 = arith.constant 2 : index
    %c0_164 = arith.constant 0 : index
    %c0_165 = arith.constant 0 : index
    %167 = vector.load %arg6[%c2_163, %c0_164, %c0_165] : memref<4x16x16xf32, #tpu.memory_space<vmem>>, vector<1x16x16xf32>
    %168 = vector.shape_cast %167 : vector<1x16x16xf32> to vector<16x16xf32>
    %c4_i32_166 = arith.constant 4 : i32
    %169 = tpu.dynamic_rotate %168 by %c4_i32_166 dim 1 : vector<16x16xf32>, i32 -> vector<16x16xf32>
    %c0_167 = arith.constant 0 : index
    %c2_168 = arith.constant 2 : index
    %c0_169 = arith.constant 0 : index
    %c0_170 = arith.constant 0 : index
    %170 = vector.load %arg3[%c0_167, %c2_168, %c0_169, %c0_170] : memref<1x4x16x16xf32, #tpu.memory_space<vmem>>, vector<1x1x16x16xf32>
    %171 = vector.shape_cast %170 : vector<1x1x16x16xf32> to vector<16x16xf32>
    %172 = arith.mulf %171, %169 : vector<16x16xf32>
    %173 = arith.addf %166, %172 : vector<16x16xf32>
    %c3_171 = arith.constant 3 : index
    %c0_172 = arith.constant 0 : index
    %c0_173 = arith.constant 0 : index
    %174 = vector.load %arg6[%c3_171, %c0_172, %c0_173] : memref<4x16x16xf32, #tpu.memory_space<vmem>>, vector<1x16x16xf32>
    %175 = vector.shape_cast %174 : vector<1x16x16xf32> to vector<16x16xf32>
    %c4_i32_174 = arith.constant 4 : i32
    %176 = tpu.dynamic_rotate %175 by %c4_i32_174 dim 1 : vector<16x16xf32>, i32 -> vector<16x16xf32>
    %c0_175 = arith.constant 0 : index
    %c3_176 = arith.constant 3 : index
    %c0_177 = arith.constant 0 : index
    %c0_178 = arith.constant 0 : index
    %177 = vector.load %arg3[%c0_175, %c3_176, %c0_177, %c0_178] : memref<1x4x16x16xf32, #tpu.memory_space<vmem>>, vector<1x1x16x16xf32>
    %178 = vector.shape_cast %177 : vector<1x1x16x16xf32> to vector<16x16xf32>
    %179 = arith.mulf %178, %176 : vector<16x16xf32>
    %180 = arith.addf %173, %179 : vector<16x16xf32>
    %c4_i32_179 = arith.constant 4 : i32
    %181 = arith.addi %0, %c4_i32_179 : i32
    %182 = vector.broadcast %181 : i32 to vector<16x16xi32>
    %183 = arith.cmpi sge, %7, %182 : vector<16x16xi32>
    %cst_180 = arith.constant 0.000000e+00 : f32
    %184 = vector.broadcast %cst_180 : f32 to vector<16x16xf32>
    %185 = arith.select %183, %180, %184 : vector<16x16xi1>, vector<16x16xf32>
    %c0_181 = arith.constant 0 : index
    %c4 = arith.constant 4 : index
    %c0_182 = arith.constant 0 : index
    %c0_183 = arith.constant 0 : index
    %186 = vector.load %arg5[%c0_181, %c4, %c0_182, %c0_183] : memref<1x8x16x16xf32, #tpu.memory_space<vmem>>, vector<1x1x16x16xf32>
    %187 = vector.shape_cast %186 : vector<1x1x16x16xf32> to vector<16x16xf32>
    %188 = vector.shape_cast %185 : vector<16x16xf32> to vector<1x1x16x16xf32>
    tpu.vector_store %arg5[%c0_181, %c4, %c0_182, %c0_183], %188 {strides = array<i32>} : memref<1x8x16x16xf32, #tpu.memory_space<vmem>>, vector<1x1x16x16xf32>,
    %cst_184 = arith.constant 0.000000e+00 : f32
    %189 = vector.broadcast %cst_184 : f32 to vector<16x16xf32>
    %c0_185 = arith.constant 0 : index
    %c0_186 = arith.constant 0 : index
    %c0_187 = arith.constant 0 : index
    %190 = vector.load %arg6[%c0_185, %c0_186, %c0_187] : memref<4x16x16xf32, #tpu.memory_space<vmem>>, vector<1x16x16xf32>
    %191 = vector.shape_cast %190 : vector<1x16x16xf32> to vector<16x16xf32>
    %c5_i32 = arith.constant 5 : i32
    %192 = tpu.dynamic_rotate %191 by %c5_i32 dim 1 : vector<16x16xf32>, i32 -> vector<16x16xf32>
    %c0_188 = arith.constant 0 : index
    %c0_189 = arith.constant 0 : index
    %c0_190 = arith.constant 0 : index
    %c0_191 = arith.constant 0 : index
    %193 = vector.load %arg3[%c0_188, %c0_189, %c0_190, %c0_191] : memref<1x4x16x16xf32, #tpu.memory_space<vmem>>, vector<1x1x16x16xf32>
    %194 = vector.shape_cast %193 : vector<1x1x16x16xf32> to vector<16x16xf32>
    %195 = arith.mulf %194, %192 : vector<16x16xf32>
    %196 = arith.addf %189, %195 : vector<16x16xf32>
    %c1_192 = arith.constant 1 : index
    %c0_193 = arith.constant 0 : index
    %c0_194 = arith.constant 0 : index
    %197 = vector.load %arg6[%c1_192, %c0_193, %c0_194] : memref<4x16x16xf32, #tpu.memory_space<vmem>>, vector<1x16x16xf32>
    %198 = vector.shape_cast %197 : vector<1x16x16xf32> to vector<16x16xf32>
    %c5_i32_195 = arith.constant 5 : i32
    %199 = tpu.dynamic_rotate %198 by %c5_i32_195 dim 1 : vector<16x16xf32>, i32 -> vector<16x16xf32>
    %c0_196 = arith.constant 0 : index
    %c1_197 = arith.constant 1 : index
    %c0_198 = arith.constant 0 : index
    %c0_199 = arith.constant 0 : index
    %200 = vector.load %arg3[%c0_196, %c1_197, %c0_198, %c0_199] : memref<1x4x16x16xf32, #tpu.memory_space<vmem>>, vector<1x1x16x16xf32>
    %201 = vector.shape_cast %200 : vector<1x1x16x16xf32> to vector<16x16xf32>
    %202 = arith.mulf %201, %199 : vector<16x16xf32>
    %203 = arith.addf %196, %202 : vector<16x16xf32>
    %c2_200 = arith.constant 2 : index
    %c0_201 = arith.constant 0 : index
    %c0_202 = arith.constant 0 : index
    %204 = vector.load %arg6[%c2_200, %c0_201, %c0_202] : memref<4x16x16xf32, #tpu.memory_space<vmem>>, vector<1x16x16xf32>
    %205 = vector.shape_cast %204 : vector<1x16x16xf32> to vector<16x16xf32>
    %c5_i32_203 = arith.constant 5 : i32
    %206 = tpu.dynamic_rotate %205 by %c5_i32_203 dim 1 : vector<16x16xf32>, i32 -> vector<16x16xf32>
    %c0_204 = arith.constant 0 : index
    %c2_205 = arith.constant 2 : index
    %c0_206 = arith.constant 0 : index
    %c0_207 = arith.constant 0 : index
    %207 = vector.load %arg3[%c0_204, %c2_205, %c0_206, %c0_207] : memref<1x4x16x16xf32, #tpu.memory_space<vmem>>, vector<1x1x16x16xf32>
    %208 = vector.shape_cast %207 : vector<1x1x16x16xf32> to vector<16x16xf32>
    %209 = arith.mulf %208, %206 : vector<16x16xf32>
    %210 = arith.addf %203, %209 : vector<16x16xf32>
    %c3_208 = arith.constant 3 : index
    %c0_209 = arith.constant 0 : index
    %c0_210 = arith.constant 0 : index
    %211 = vector.load %arg6[%c3_208, %c0_209, %c0_210] : memref<4x16x16xf32, #tpu.memory_space<vmem>>, vector<1x16x16xf32>
    %212 = vector.shape_cast %211 : vector<1x16x16xf32> to vector<16x16xf32>
    %c5_i32_211 = arith.constant 5 : i32
    %213 = tpu.dynamic_rotate %212 by %c5_i32_211 dim 1 : vector<16x16xf32>, i32 -> vector<16x16xf32>
    %c0_212 = arith.constant 0 : index
    %c3_213 = arith.constant 3 : index
    %c0_214 = arith.constant 0 : index
    %c0_215 = arith.constant 0 : index
    %214 = vector.load %arg3[%c0_212, %c3_213, %c0_214, %c0_215] : memref<1x4x16x16xf32, #tpu.memory_space<vmem>>, vector<1x1x16x16xf32>
    %215 = vector.shape_cast %214 : vector<1x1x16x16xf32> to vector<16x16xf32>
    %216 = arith.mulf %215, %213 : vector<16x16xf32>
    %217 = arith.addf %210, %216 : vector<16x16xf32>
    %c5_i32_216 = arith.constant 5 : i32
    %218 = arith.addi %0, %c5_i32_216 : i32
    %219 = vector.broadcast %218 : i32 to vector<16x16xi32>
    %220 = arith.cmpi sge, %7, %219 : vector<16x16xi32>
    %cst_217 = arith.constant 0.000000e+00 : f32
    %221 = vector.broadcast %cst_217 : f32 to vector<16x16xf32>
    %222 = arith.select %220, %217, %221 : vector<16x16xi1>, vector<16x16xf32>
    %c0_218 = arith.constant 0 : index
    %c5 = arith.constant 5 : index
    %c0_219 = arith.constant 0 : index
    %c0_220 = arith.constant 0 : index
    %223 = vector.load %arg5[%c0_218, %c5, %c0_219, %c0_220] : memref<1x8x16x16xf32, #tpu.memory_space<vmem>>, vector<1x1x16x16xf32>
    %224 = vector.shape_cast %223 : vector<1x1x16x16xf32> to vector<16x16xf32>
    %225 = vector.shape_cast %222 : vector<16x16xf32> to vector<1x1x16x16xf32>
    tpu.vector_store %arg5[%c0_218, %c5, %c0_219, %c0_220], %225 {strides = array<i32>} : memref<1x8x16x16xf32, #tpu.memory_space<vmem>>, vector<1x1x16x16xf32>,
    %cst_221 = arith.constant 0.000000e+00 : f32
    %226 = vector.broadcast %cst_221 : f32 to vector<16x16xf32>
    %c0_222 = arith.constant 0 : index
    %c0_223 = arith.constant 0 : index
    %c0_224 = arith.constant 0 : index
    %227 = vector.load %arg6[%c0_222, %c0_223, %c0_224] : memref<4x16x16xf32, #tpu.memory_space<vmem>>, vector<1x16x16xf32>
    %228 = vector.shape_cast %227 : vector<1x16x16xf32> to vector<16x16xf32>
    %c6_i32 = arith.constant 6 : i32
    %229 = tpu.dynamic_rotate %228 by %c6_i32 dim 1 : vector<16x16xf32>, i32 -> vector<16x16xf32>
    %c0_225 = arith.constant 0 : index
    %c0_226 = arith.constant 0 : index
    %c0_227 = arith.constant 0 : index
    %c0_228 = arith.constant 0 : index
    %230 = vector.load %arg3[%c0_225, %c0_226, %c0_227, %c0_228] : memref<1x4x16x16xf32, #tpu.memory_space<vmem>>, vector<1x1x16x16xf32>
    %231 = vector.shape_cast %230 : vector<1x1x16x16xf32> to vector<16x16xf32>
    %232 = arith.mulf %231, %229 : vector<16x16xf32>
    %233 = arith.addf %226, %232 : vector<16x16xf32>
    %c1_229 = arith.constant 1 : index
    %c0_230 = arith.constant 0 : index
    %c0_231 = arith.constant 0 : index
    %234 = vector.load %arg6[%c1_229, %c0_230, %c0_231] : memref<4x16x16xf32, #tpu.memory_space<vmem>>, vector<1x16x16xf32>
    %235 = vector.shape_cast %234 : vector<1x16x16xf32> to vector<16x16xf32>
    %c6_i32_232 = arith.constant 6 : i32
    %236 = tpu.dynamic_rotate %235 by %c6_i32_232 dim 1 : vector<16x16xf32>, i32 -> vector<16x16xf32>
    %c0_233 = arith.constant 0 : index
    %c1_234 = arith.constant 1 : index
    %c0_235 = arith.constant 0 : index
    %c0_236 = arith.constant 0 : index
    %237 = vector.load %arg3[%c0_233, %c1_234, %c0_235, %c0_236] : memref<1x4x16x16xf32, #tpu.memory_space<vmem>>, vector<1x1x16x16xf32>
    %238 = vector.shape_cast %237 : vector<1x1x16x16xf32> to vector<16x16xf32>
    %239 = arith.mulf %238, %236 : vector<16x16xf32>
    %240 = arith.addf %233, %239 : vector<16x16xf32>
    %c2_237 = arith.constant 2 : index
    %c0_238 = arith.constant 0 : index
    %c0_239 = arith.constant 0 : index
    %241 = vector.load %arg6[%c2_237, %c0_238, %c0_239] : memref<4x16x16xf32, #tpu.memory_space<vmem>>, vector<1x16x16xf32>
    %242 = vector.shape_cast %241 : vector<1x16x16xf32> to vector<16x16xf32>
    %c6_i32_240 = arith.constant 6 : i32
    %243 = tpu.dynamic_rotate %242 by %c6_i32_240 dim 1 : vector<16x16xf32>, i32 -> vector<16x16xf32>
    %c0_241 = arith.constant 0 : index
    %c2_242 = arith.constant 2 : index
    %c0_243 = arith.constant 0 : index
    %c0_244 = arith.constant 0 : index
    %244 = vector.load %arg3[%c0_241, %c2_242, %c0_243, %c0_244] : memref<1x4x16x16xf32, #tpu.memory_space<vmem>>, vector<1x1x16x16xf32>
    %245 = vector.shape_cast %244 : vector<1x1x16x16xf32> to vector<16x16xf32>
    %246 = arith.mulf %245, %243 : vector<16x16xf32>
    %247 = arith.addf %240, %246 : vector<16x16xf32>
    %c3_245 = arith.constant 3 : index
    %c0_246 = arith.constant 0 : index
    %c0_247 = arith.constant 0 : index
    %248 = vector.load %arg6[%c3_245, %c0_246, %c0_247] : memref<4x16x16xf32, #tpu.memory_space<vmem>>, vector<1x16x16xf32>
    %249 = vector.shape_cast %248 : vector<1x16x16xf32> to vector<16x16xf32>
    %c6_i32_248 = arith.constant 6 : i32
    %250 = tpu.dynamic_rotate %249 by %c6_i32_248 dim 1 : vector<16x16xf32>, i32 -> vector<16x16xf32>
    %c0_249 = arith.constant 0 : index
    %c3_250 = arith.constant 3 : index
    %c0_251 = arith.constant 0 : index
    %c0_252 = arith.constant 0 : index
    %251 = vector.load %arg3[%c0_249, %c3_250, %c0_251, %c0_252] : memref<1x4x16x16xf32, #tpu.memory_space<vmem>>, vector<1x1x16x16xf32>
    %252 = vector.shape_cast %251 : vector<1x1x16x16xf32> to vector<16x16xf32>
    %253 = arith.mulf %252, %250 : vector<16x16xf32>
    %254 = arith.addf %247, %253 : vector<16x16xf32>
    %c6_i32_253 = arith.constant 6 : i32
    %255 = arith.addi %0, %c6_i32_253 : i32
    %256 = vector.broadcast %255 : i32 to vector<16x16xi32>
    %257 = arith.cmpi sge, %7, %256 : vector<16x16xi32>
    %cst_254 = arith.constant 0.000000e+00 : f32
    %258 = vector.broadcast %cst_254 : f32 to vector<16x16xf32>
    %259 = arith.select %257, %254, %258 : vector<16x16xi1>, vector<16x16xf32>
    %c0_255 = arith.constant 0 : index
    %c6 = arith.constant 6 : index
    %c0_256 = arith.constant 0 : index
    %c0_257 = arith.constant 0 : index
    %260 = vector.load %arg5[%c0_255, %c6, %c0_256, %c0_257] : memref<1x8x16x16xf32, #tpu.memory_space<vmem>>, vector<1x1x16x16xf32>
    %261 = vector.shape_cast %260 : vector<1x1x16x16xf32> to vector<16x16xf32>
    %262 = vector.shape_cast %259 : vector<16x16xf32> to vector<1x1x16x16xf32>
    tpu.vector_store %arg5[%c0_255, %c6, %c0_256, %c0_257], %262 {strides = array<i32>} : memref<1x8x16x16xf32, #tpu.memory_space<vmem>>, vector<1x1x16x16xf32>,
    %cst_258 = arith.constant 0.000000e+00 : f32
    %263 = vector.broadcast %cst_258 : f32 to vector<16x16xf32>
    %c0_259 = arith.constant 0 : index
    %c0_260 = arith.constant 0 : index
    %c0_261 = arith.constant 0 : index
    %264 = vector.load %arg6[%c0_259, %c0_260, %c0_261] : memref<4x16x16xf32, #tpu.memory_space<vmem>>, vector<1x16x16xf32>
    %265 = vector.shape_cast %264 : vector<1x16x16xf32> to vector<16x16xf32>
    %c7_i32 = arith.constant 7 : i32
    %266 = tpu.dynamic_rotate %265 by %c7_i32 dim 1 : vector<16x16xf32>, i32 -> vector<16x16xf32>
    %c0_262 = arith.constant 0 : index
    %c0_263 = arith.constant 0 : index
    %c0_264 = arith.constant 0 : index
    %c0_265 = arith.constant 0 : index
    %267 = vector.load %arg3[%c0_262, %c0_263, %c0_264, %c0_265] : memref<1x4x16x16xf32, #tpu.memory_space<vmem>>, vector<1x1x16x16xf32>
    %268 = vector.shape_cast %267 : vector<1x1x16x16xf32> to vector<16x16xf32>
    %269 = arith.mulf %268, %266 : vector<16x16xf32>
    %270 = arith.addf %263, %269 : vector<16x16xf32>
    %c1_266 = arith.constant 1 : index
    %c0_267 = arith.constant 0 : index
    %c0_268 = arith.constant 0 : index
    %271 = vector.load %arg6[%c1_266, %c0_267, %c0_268] : memref<4x16x16xf32, #tpu.memory_space<vmem>>, vector<1x16x16xf32>
    %272 = vector.shape_cast %271 : vector<1x16x16xf32> to vector<16x16xf32>
    %c7_i32_269 = arith.constant 7 : i32
    %273 = tpu.dynamic_rotate %272 by %c7_i32_269 dim 1 : vector<16x16xf32>, i32 -> vector<16x16xf32>
    %c0_270 = arith.constant 0 : index
    %c1_271 = arith.constant 1 : index
    %c0_272 = arith.constant 0 : index
    %c0_273 = arith.constant 0 : index
    %274 = vector.load %arg3[%c0_270, %c1_271, %c0_272, %c0_273] : memref<1x4x16x16xf32, #tpu.memory_space<vmem>>, vector<1x1x16x16xf32>
    %275 = vector.shape_cast %274 : vector<1x1x16x16xf32> to vector<16x16xf32>
    %276 = arith.mulf %275, %273 : vector<16x16xf32>
    %277 = arith.addf %270, %276 : vector<16x16xf32>
    %c2_274 = arith.constant 2 : index
    %c0_275 = arith.constant 0 : index
    %c0_276 = arith.constant 0 : index
    %278 = vector.load %arg6[%c2_274, %c0_275, %c0_276] : memref<4x16x16xf32, #tpu.memory_space<vmem>>, vector<1x16x16xf32>
    %279 = vector.shape_cast %278 : vector<1x16x16xf32> to vector<16x16xf32>
    %c7_i32_277 = arith.constant 7 : i32
    %280 = tpu.dynamic_rotate %279 by %c7_i32_277 dim 1 : vector<16x16xf32>, i32 -> vector<16x16xf32>
    %c0_278 = arith.constant 0 : index
    %c2_279 = arith.constant 2 : index
    %c0_280 = arith.constant 0 : index
    %c0_281 = arith.constant 0 : index
    %281 = vector.load %arg3[%c0_278, %c2_279, %c0_280, %c0_281] : memref<1x4x16x16xf32, #tpu.memory_space<vmem>>, vector<1x1x16x16xf32>
    %282 = vector.shape_cast %281 : vector<1x1x16x16xf32> to vector<16x16xf32>
    %283 = arith.mulf %282, %280 : vector<16x16xf32>
    %284 = arith.addf %277, %283 : vector<16x16xf32>
    %c3_282 = arith.constant 3 : index
    %c0_283 = arith.constant 0 : index
    %c0_284 = arith.constant 0 : index
    %285 = vector.load %arg6[%c3_282, %c0_283, %c0_284] : memref<4x16x16xf32, #tpu.memory_space<vmem>>, vector<1x16x16xf32>
    %286 = vector.shape_cast %285 : vector<1x16x16xf32> to vector<16x16xf32>
    %c7_i32_285 = arith.constant 7 : i32
    %287 = tpu.dynamic_rotate %286 by %c7_i32_285 dim 1 : vector<16x16xf32>, i32 -> vector<16x16xf32>
    %c0_286 = arith.constant 0 : index
    %c3_287 = arith.constant 3 : index
    %c0_288 = arith.constant 0 : index
    %c0_289 = arith.constant 0 : index
    %288 = vector.load %arg3[%c0_286, %c3_287, %c0_288, %c0_289] : memref<1x4x16x16xf32, #tpu.memory_space<vmem>>, vector<1x1x16x16xf32>
    %289 = vector.shape_cast %288 : vector<1x1x16x16xf32> to vector<16x16xf32>
    %290 = arith.mulf %289, %287 : vector<16x16xf32>
    %291 = arith.addf %284, %290 : vector<16x16xf32>
    %c7_i32_290 = arith.constant 7 : i32
    %292 = arith.addi %0, %c7_i32_290 : i32
    %293 = vector.broadcast %292 : i32 to vector<16x16xi32>
    %294 = arith.cmpi sge, %7, %293 : vector<16x16xi32>
    %cst_291 = arith.constant 0.000000e+00 : f32
    %295 = vector.broadcast %cst_291 : f32 to vector<16x16xf32>
    %296 = arith.select %294, %291, %295 : vector<16x16xi1>, vector<16x16xf32>
    %c0_292 = arith.constant 0 : index
    %c7 = arith.constant 7 : index
    %c0_293 = arith.constant 0 : index
    %c0_294 = arith.constant 0 : index
    %297 = vector.load %arg5[%c0_292, %c7, %c0_293, %c0_294] : memref<1x8x16x16xf32, #tpu.memory_space<vmem>>, vector<1x1x16x16xf32>
    %298 = vector.shape_cast %297 : vector<1x1x16x16xf32> to vector<16x16xf32>
    %299 = vector.shape_cast %296 : vector<16x16xf32> to vector<1x1x16x16xf32>
    tpu.vector_store %arg5[%c0_292, %c7, %c0_293, %c0_294], %299 {strides = array<i32>} : memref<1x8x16x16xf32, #tpu.memory_space<vmem>>, vector<1x1x16x16xf32>,
    return
  }
  func.func @transform_0(%arg0: i32, %arg1: i32, %arg2: i32) -> (i32, i32, i32, i32) {
    %c0_i32 = arith.constant 0 : i32
    %c0_i32_0 = arith.constant 0 : i32
    %c0_i32_1 = arith.constant 0 : i32
    return %arg0, %c0_i32, %arg1, %c0_i32_0 : i32, i32, i32, i32
  }
  func.func @transform_1(%arg0: i32, %arg1: i32, %arg2: i32) -> (i32, i32, i32, i32) {
    %c0_i32 = arith.constant 0 : i32
    %c0_i32_0 = arith.constant 0 : i32
    %c0_i32_1 = arith.constant 0 : i32
    return %arg0, %c0_i32, %arg1, %c0_i32_0 : i32, i32, i32, i32
  }
  func.func @transform_2(%arg0: i32, %arg1: i32, %arg2: i32) -> (i32, i32, i32, i32) {
    %c0_i32 = arith.constant 0 : i32
    %c0_i32_0 = arith.constant 0 : i32
    return %arg0, %arg2, %arg1, %c0_i32 : i32, i32, i32, i32
  }
}

</mosaic_0001>

<llo_original>
// kernel: tpu_custom_call.1
$region0: #{tpu_custom_call.1}
  #allocation0 [shape = 'u32[]', space=smem, size = 0x4, offset = 0x4, fixed_abs, tag = 'smem constant byte address 0x4 - core index']
  #allocation1 [shape = 'u32[144,128]{1,0:T(1,128)}', space=vmem, size = 0x12000, scoped, tag = 'internal scratch']
  #allocation2 [shape = 'f32[4,16,16]{2,1,0:T(8,128)}', space=vmem, size = 0x8000, scoped, tag = 'scratch operand']
  %s0 = inlined_call_operand.hbm [shape: f32[2,4,16,16], index: 0, kind: input, shape index: {}]
  %s1 = inlined_call_operand.hbm [shape: f32[2,4,16,16], index: 1, kind: input, shape index: {}]
  %s2 = inlined_call_operand.hbm [shape: f32[2,8,16,16], index: 2, kind: output, shape index: {}]
  %s3 = sld [smem:[#allocation0]]
  $region57: #{tpu_custom_call.1} parent=0
    _
  %s5 = ssub.s32 1, %s3
  %s6 = scalar_select 0, %s5, %s3
  $region1: #{tpu_custom_call.1} parent=0
    #allocation3 [shape = 'u8[65536]{0}', space=vmem, size = 0x10000, scoped, tag = 'input window, operand 0']
    #allocation4 [shape = 's32[2]{0}', space=sflag, size = 0x8, scoped, tag = 'scoped memory for tpu_custom_call.1']
    #allocation5 [shape = 's32[2]{0}', space=sflag, size = 0x8, scoped, tag = 'scoped memory for tpu_custom_call.1']
    #allocation6 [shape = 'u8[65536]{0}', space=vmem, size = 0x10000, scoped, tag = 'input window, operand 1']
    #allocation7 [shape = 's32[2]{0}', space=sflag, size = 0x8, scoped, tag = 'scoped memory for tpu_custom_call.1']
    #allocation8 [shape = 'u8[131072]{0}', space=vmem, size = 0x20000, scoped, tag = 'output window, operand 0']
    %7 = vsyncpa [#allocation4], 0
    %s8 = scalar_lea.sflag [#allocation4], 1
    %9 = vsyncpa %s8, 0
    %10 = vsyncpa [#allocation7], 0
    %s11 = scalar_lea.sflag [#allocation7], 1
    %12 = vsyncpa %s11, 0
    %13 = vsyncpa [#allocation5], 0
    %s14 = scalar_lea.sflag [#allocation5], 1
    %15 = vsyncpa %s14, 0
    loop: start=0, step=1, limit=4
    $region2: #{tpu_custom_call.1} parent=1 // loop_pre_header
      _
    $region3: #{tpu_custom_call.1} parent=1 // loop_header
      %s17 = sphi 0, %s21
      %p18 = scmp.ge.s32.totalorder %s17, 4
      %s24 = sphi 0, %s43
      %s25 = sphi 0, %s39
      %s26 = sphi 0, %s35
      %s27 = sphi 0, %s24
      %s28 = sphi 0, %s25
      %s29 = sphi 0, %s26
      %s30 = sphi 0, %s27
      %s31 = sphi 0, %s28
      %s32 = sphi 0, %s29
      %s48 = sphi 0, %s50
      %s51 = sphi 0, %s48
      %s52 = sphi 0, %s51
      %s68 = sphi 0, %s52
      %s76 = sphi 0, %s78
      %s79 = sphi 0, %s76
      %s80 = sphi 0, %s79
      %s96 = sphi 0, %s80
      %s106 = sphi 0, %s108
      %s109 = sphi 0, %s106
      %s110 = sphi 0, %s109
      %s126 = sphi 0, %s110
    $region4: #{tpu_custom_call.1} parent=1 // loop_header_branch
      %20 = sbr.rel (%p18) target = $region8
    $region5: #{tpu_custom_call.1} parent=1 // loop_body
      %s22 = ssub.s32 %s17, 1
      %s23 = ssub.s32 %s17, 2
      %s33 = sadd.s32 1, %s26
      %p34 = scmp.ge.s32.totalorder %s33, 1
      %s35 = scalar_select %p34, 0, %s33
      %s36 = sadd.s32 1, %s25
      %s37 = scalar_select %p34, %s36, %s25
      %p38 = scmp.ge.s32.totalorder %s37, 1
      %s39 = scalar_select %p38, 0, %s37
      %s40 = sadd.s32 1, %s24
      %s41 = scalar_select %p38, %s40, %s24
      %p42 = scmp.ge.s32.totalorder %s41, 2
      %s43 = scalar_select %p42, 0, %s41
      %s44 = ssub.s32 %s24, %s43
      %s45 = ssub.s32 %s25, %s39
      %s46 = sor.u32 %s44, %s45
      %p47 = scmp.eq.s32.totalorder %s46, 0
      %s49 = sadd.s32 %s48, 1
      %s50 = scalar_select %p47, %s48, %s49
      %p53 = pneg %p47
      %p54 = scmp.eq.s32.totalorder %s17, 1
      %p55 = por %p53, %p54
      %p56 = scmp.ne.s32.totalorder %s48, %s51
      %p57 = scmp.eq.s32.totalorder %s17, 0
      %p58 = por %p56, %p57
      %p59 = scmp.ne.s32.totalorder %s48, %s51
      %p60 = scmp.eq.s32.totalorder %s22, 1
      %p61 = por %p59, %p60
      %p62 = scmp.ne.s32.totalorder %s51, %s52
      %p63 = scmp.eq.s32.totalorder %s22, 0
      %p64 = por %p62, %p63
      %p65 = scmp.ne.s32.totalorder %s51, %s52
      %p66 = scmp.eq.s32.totalorder %s23, 1
      %p67 = por %p65, %p66
      %p69 = scmp.ne.s32.totalorder %s52, %s68
      %p70 = scmp.eq.s32.totalorder %s23, 0
      %p71 = por %p69, %p70
      %s72 = ssub.s32 %s24, %s43
      %s73 = ssub.s32 %s25, %s39
      %s74 = sor.u32 %s72, %s73
      %p75 = scmp.eq.s32.totalorder %s74, 0
      %s77 = sadd.s32 %s76, 1
      %s78 = scalar_select %p75, %s76, %s77
      %p81 = pneg %p75
      %p82 = scmp.eq.s32.totalorder %s17, 1
      %p83 = por %p81, %p82
      %p84 = scmp.ne.s32.totalorder %s76, %s79
      %p85 = scmp.eq.s32.totalorder %s17, 0
      %p86 = por %p84, %p85
      %p87 = scmp.ne.s32.totalorder %s76, %s79
      %p88 = scmp.eq.s32.totalorder %s22, 1
      %p89 = por %p87, %p88
      %p90 = scmp.ne.s32.totalorder %s79, %s80
      %p91 = scmp.eq.s32.totalorder %s22, 0
      %p92 = por %p90, %p91
      %p93 = scmp.ne.s32.totalorder %s79, %s80
      %p94 = scmp.eq.s32.totalorder %s23, 1
      %p95 = por %p93, %p94
      %p97 = scmp.ne.s32.totalorder %s80, %s96
      %p98 = scmp.eq.s32.totalorder %s23, 0
      %p99 = por %p97, %p98
      %s100 = ssub.s32 %s24, %s43
      %s101 = ssub.s32 %s26, %s35
      %s102 = sor.u32 %s100, %s101
      %s103 = ssub.s32 %s25, %s39
      %s104 = sor.u32 %s102, %s103
      %p105 = scmp.eq.s32.totalorder %s104, 0
      %s107 = sadd.s32 %s106, 1
      %s108 = scalar_select %p105, %s106, %s107
      %p111 = pneg %p105
      %p112 = scmp.eq.s32.totalorder %s17, 1
      %p113 = por %p111, %p112
      %p114 = scmp.ne.s32.totalorder %s106, %s109
      %p115 = scmp.eq.s32.totalorder %s17, 0
      %p116 = por %p114, %p115
      %p117 = scmp.ne.s32.totalorder %s106, %s109
      %p118 = scmp.eq.s32.totalorder %s22, 1
      %p119 = por %p117, %p118
      %p120 = scmp.ne.s32.totalorder %s109, %s110
      %p121 = scmp.eq.s32.totalorder %s22, 0
      %p122 = por %p120, %p121
      %p123 = scmp.ne.s32.totalorder %s109, %s110
      %p124 = scmp.eq.s32.totalorder %s23, 1
      %p125 = por %p123, %p124
      %p127 = scmp.ne.s32.totalorder %s110, %s126
      %p128 = scmp.eq.s32.totalorder %s23, 0
      %p129 = por %p127, %p128
      %p130 = scmp.le.s32.totalorder 1, %s17
      %p131 = scmp.lt.s32.totalorder %s17, 3
      %p132 = pnand %p130, %p131
      %p133 = pneg %p132
      // Predicated region
      $region9: #{tpu_custom_call.1} parent=5 // pred_check
        _
      $region10: #{tpu_custom_call.1} parent=5 // pred_check_branch
        %135 = sbr.rel (%p132) target = $region12
      $region11: #{tpu_custom_call.1} parent=5 // pred_region
        %s136 = ssub.s32 %s17, 1
      $region12: #{tpu_custom_call.1} parent=5 // pred_fallthru
        _
      %p137 = scmp.lt.s32.totalorder %s17, 2
      // Predicated region
      $region13: #{tpu_custom_call.1} parent=5 // pred_check
        %p138 = pneg %p137
      $region14: #{tpu_custom_call.1} parent=5 // pred_check_branch
        %140 = sbr.rel (%p138) target = $region16
      $region15: #{tpu_custom_call.1} parent=5 // pred_region
        // Predicated region
        $region17: #{tpu_custom_call.1} parent=15 // pred_check
          %p141 = pneg %p58
        $region18: #{tpu_custom_call.1} parent=15 // pred_check_branch
          %143 = sbr.rel (%p141) target = $region20
        $region19: #{tpu_custom_call.1} parent=15 // pred_region
          %s144 = sand.u32 %s48, 1
          %s145 = scalar_lea.sflag [#allocation4], %s144
          %s146 = sand.u32 %s48, 1
          %s147 = smul.addr %s146, 64
          %s148 = scalar_lea.vmem [#allocation3], %s147
          %s149 = smul.u32 2, %s25
          %s151 = ssub.s32 1024, 1024
          %152 = vsyncadd %s145, %s151
          %s153 = smul.addr %s24, 8
          %s154 = sadd.s32 %s149, %s153
          %s155 = smul.addr %s154, 128
          %s156 = scalar_lea.hbm %s0, %s155
          %s157 = sshll.u32 %s148, 4
          %s158 = int_to_ptr.vmem [resolvable:$true] %s157
          %163 = dma.hbm_to_vmem [thread:$0]  %s156, 1024, %s158, %s145, 128, 128, 8
        $region20: #{tpu_custom_call.1} parent=15 // pred_fallthru
          _
        // Predicated region
        $region21: #{tpu_custom_call.1} parent=15 // pred_check
          %p164 = pneg %p86
        $region22: #{tpu_custom_call.1} parent=15 // pred_check_branch
          %166 = sbr.rel (%p164) target = $region24
        $region23: #{tpu_custom_call.1} parent=15 // pred_region
          %s167 = sand.u32 %s76, 1
          %s168 = scalar_lea.sflag [#allocation7], %s167
          %s169 = sand.u32 %s76, 1
          %s170 = smul.addr %s169, 64
          %s171 = scalar_lea.vmem [#allocation6], %s170
          %s172 = smul.u32 2, %s25
          %s174 = ssub.s32 1024, 1024
          %175 = vsyncadd %s168, %s174
          %s176 = smul.addr %s24, 8
          %s177 = sadd.s32 %s172, %s176
          %s178 = smul.addr %s177, 128
          %s179 = scalar_lea.hbm %s1, %s178
          %s180 = sshll.u32 %s171, 4
          %s181 = int_to_ptr.vmem [resolvable:$true] %s180
          %186 = dma.hbm_to_vmem [thread:$0]  %s179, 1024, %s181, %s168, 128, 128, 8
        $region24: #{tpu_custom_call.1} parent=15 // pred_fallthru
          _
      $region16: #{tpu_custom_call.1} parent=5 // pred_fallthru
        _
      %p187 = scmp.le.s32.totalorder 1, %s17
      %p188 = scmp.lt.s32.totalorder %s17, 3
      %p189 = pnand %p187, %p188
      %p190 = pneg %p189
      // Predicated region
      $region25: #{tpu_custom_call.1} parent=5 // pred_check
        _
      $region26: #{tpu_custom_call.1} parent=5 // pred_check_branch
        %192 = sbr.rel (%p189) target = $region28
      $region27: #{tpu_custom_call.1} parent=5 // pred_region
        %s193 = ssub.s32 %s17, 1
        %s194 = sand.u32 %s51, 1
        %s195 = scalar_lea.sflag [#allocation4], %s194
        %s196 = sand.u32 %s51, 1
        %s197 = smul.addr %s196, 64
        %s198 = scalar_lea.vmem [#allocation3], %s197
        // Predicated region
        $region29: #{tpu_custom_call.1} parent=27 // pred_check
          %p199 = pneg %p64
        $region30: #{tpu_custom_call.1} parent=27 // pred_check_branch
          %201 = sbr.rel (%p199) target = $region32
        $region31: #{tpu_custom_call.1} parent=27 // pred_region
          %202 = dma.done %s195, 1024
        $region32: #{tpu_custom_call.1} parent=27 // pred_fallthru
          _
        %s203 = sand.u32 %s79, 1
        %s204 = scalar_lea.sflag [#allocation7], %s203
        %s205 = sand.u32 %s79, 1
        %s206 = smul.addr %s205, 64
        %s207 = scalar_lea.vmem [#allocation6], %s206
        // Predicated region
        $region33: #{tpu_custom_call.1} parent=27 // pred_check
          %p208 = pneg %p92
        $region34: #{tpu_custom_call.1} parent=27 // pred_check_branch
          %210 = sbr.rel (%p208) target = $region36
        $region35: #{tpu_custom_call.1} parent=27 // pred_region
          %211 = dma.done %s204, 1024
        $region36: #{tpu_custom_call.1} parent=27 // pred_fallthru
          _
        %s212 = sand.u32 %s51, 1
        %s213 = scalar_lea.sflag [#allocation4], %s212
        %s214 = sand.u32 %s51, 1
        %s215 = smul.addr %s214, 64
        %s216 = scalar_lea.vmem [#allocation3], %s215
        %p217 = pneg %p64
        %p218 = pneg %p61
        %s219 = sand.u32 %s79, 1
        %s220 = scalar_lea.sflag [#allocation7], %s219
        %s221 = sand.u32 %s79, 1
        %s222 = smul.addr %s221, 64
        %s223 = scalar_lea.vmem [#allocation6], %s222
        %p224 = pneg %p92
        %p225 = pneg %p89
        %p226 = pneg %p122
        %p227 = pneg %p119
        %s228 = sand.u32 %s109, 1
        %s229 = scalar_lea.sflag [#allocation5], %s228
        %s230 = sand.u32 %s109, 1
        %s231 = smul.addr %s230, 128
        %s232 = scalar_lea.vmem [#allocation8], %s231
        %s233 = smul.u32 2, %s28
        %s234 = smul.u32 2, %s28
        %s235 = smul.u32 8, %s29
        %s236 = smul.u32 2, %s28
        %s237 = smul.u32 %s29, 8
        %p238 = scmp.eq.s32.totalorder %s29, 0
        // Predicated region
        $region37: #{tpu_custom_call.1} parent=27 // pred_check
          %p239 = pneg %p238
        $region38: #{tpu_custom_call.1} parent=27 // pred_check_branch
          %241 = sbr.rel (%p239) target = $region40
        $region39: #{tpu_custom_call.1} parent=27 // pred_region
          %v242 = vld [vmem:[%s207] sm:$0xff]
          %v243 = vld [vmem:[%s207 + $0x8] sm:$0xff]
          %vm244 = vcmask 130048
          %245 = vst.msk [vmem:[#allocation2] sm:$0xff] %vm244, %v242
          %246 = vst.msk [vmem:[#allocation2 + $0x8] sm:$0xff] %vm244, %v243
          %s247 = scalar_lea.vmem %s207, 16 [#allocation6]
          %v248 = vld [vmem:[%s247] sm:$0xff]
          %v249 = vld [vmem:[%s247 + $0x8] sm:$0xff]
          %s250 = scalar_lea.vmem [#allocation2], 16
          %251 = vst.msk [vmem:[%s250] sm:$0xff] %vm244, %v248
          %252 = vst.msk [vmem:[%s250 + $0x8] sm:$0xff] %vm244, %v249
          %s253 = scalar_lea.vmem %s207, 32 [#allocation6]
          %v254 = vld [vmem:[%s253] sm:$0xff]
          %v255 = vld [vmem:[%s253 + $0x8] sm:$0xff]
          %s256 = scalar_lea.vmem [#allocation2], 32
          %257 = vst.msk [vmem:[%s256] sm:$0xff] %vm244, %v254
          %258 = vst.msk [vmem:[%s256 + $0x8] sm:$0xff] %vm244, %v255
          %s259 = scalar_lea.vmem %s207, 48 [#allocation6]
          %v260 = vld [vmem:[%s259] sm:$0xff]
          %v261 = vld [vmem:[%s259 + $0x8] sm:$0xff]
          %s262 = scalar_lea.vmem [#allocation2], 48
          %263 = vst.msk [vmem:[%s262] sm:$0xff] %vm244, %v260
          %264 = vst.msk [vmem:[%s262 + $0x8] sm:$0xff] %vm244, %v261
        $region40: #{tpu_custom_call.1} parent=27 // pred_fallthru
          _
        %p265 = scmp.gt.s32.totalorder %s29, 0
        // Predicated region
        $region41: #{tpu_custom_call.1} parent=27 // pred_check
          %p266 = pneg %p265
        $region42: #{tpu_custom_call.1} parent=27 // pred_check_branch
          %268 = sbr.rel (%p266) target = $region44
        $region43: #{tpu_custom_call.1} parent=27 // pred_region
          %v269 = vld [vmem:[#allocation2] sm:$0xff]
          %v270 = vld [vmem:[#allocation2 + $0x8] sm:$0xff]
          %vm271 = vcmask 1047680
          %272 = vrot.lane.b32.xlu0 %v269, 16
          %v273 = vpop.permute.xlu0 %272
          %v274 = vsel %vm271, %v273, %v269
          %275 = vrot.lane.b32.xlu0 %v270, 16
          %v276 = vpop.permute.xlu0 %275
          %v277 = vsel %vm271, %v276, %v270
          %278 = vrot.lane.b32.xlu0 %v274, 16
          %v279 = vpop.permute.xlu0 %278
          %280 = vrot.lane.b32.xlu0 %v277, 16
          %v281 = vpop.permute.xlu0 %280
          %v282 = vsel %vm271, %v279, %v269
          %v283 = vsel %vm271, %v281, %v270
          %286 = vrot.lane.b32.xlu0 %v282, 120
          %v287 = vpop.permute.xlu0 %286
          %288 = vrot.lane.b32.xlu0 %v283, 120
          %v289 = vpop.permute.xlu0 %288
          %vm292 = vcmask 130048
          %293 = vst.msk [vmem:[#allocation2] sm:$0xff] %vm292, %v287
          %294 = vst.msk [vmem:[#allocation2 + $0x8] sm:$0xff] %vm292, %v289
          %s295 = scalar_lea.vmem [#allocation2], 16
          %v296 = vld [vmem:[%s295] sm:$0xff]
          %v297 = vld [vmem:[%s295 + $0x8] sm:$0xff]
          %298 = vrot.lane.b32.xlu0 %v296, 16
          %v299 = vpop.permute.xlu0 %298
          %v300 = vsel %vm271, %v299, %v296
          %301 = vrot.lane.b32.xlu0 %v297, 16
          %v302 = vpop.permute.xlu0 %301
          %v303 = vsel %vm271, %v302, %v297
          %304 = vrot.lane.b32.xlu0 %v300, 16
          %v305 = vpop.permute.xlu0 %304
          %306 = vrot.lane.b32.xlu0 %v303, 16
          %v307 = vpop.permute.xlu0 %306
          %v308 = vsel %vm271, %v305, %v296
          %v309 = vsel %vm271, %v307, %v297
          %312 = vrot.lane.b32.xlu0 %v308, 120
          %v313 = vpop.permute.xlu0 %312
          %314 = vrot.lane.b32.xlu0 %v309, 120
          %v315 = vpop.permute.xlu0 %314
          %318 = vst.msk [vmem:[%s295] sm:$0xff] %vm292, %v313
          %319 = vst.msk [vmem:[%s295 + $0x8] sm:$0xff] %vm292, %v315
          %s320 = scalar_lea.vmem [#allocation2], 32
          %v321 = vld [vmem:[%s320] sm:$0xff]
          %v322 = vld [vmem:[%s320 + $0x8] sm:$0xff]
          %323 = vrot.lane.b32.xlu0 %v321, 16
          %v324 = vpop.permute.xlu0 %323
          %v325 = vsel %vm271, %v324, %v321
          %326 = vrot.lane.b32.xlu0 %v322, 16
          %v327 = vpop.permute.xlu0 %326
          %v328 = vsel %vm271, %v327, %v322
          %329 = vrot.lane.b32.xlu0 %v325, 16
          %v330 = vpop.permute.xlu0 %329
          %331 = vrot.lane.b32.xlu0 %v328, 16
          %v332 = vpop.permute.xlu0 %331
          %v333 = vsel %vm271, %v330, %v321
          %v334 = vsel %vm271, %v332, %v322
          %337 = vrot.lane.b32.xlu0 %v333, 120
          %v338 = vpop.permute.xlu0 %337
          %339 = vrot.lane.b32.xlu0 %v334, 120
          %v340 = vpop.permute.xlu0 %339
          %343 = vst.msk [vmem:[%s320] sm:$0xff] %vm292, %v338
          %344 = vst.msk [vmem:[%s320 + $0x8] sm:$0xff] %vm292, %v340
          %s345 = scalar_lea.vmem [#allocation2], 48
          %v346 = vld [vmem:[%s345] sm:$0xff]
          %v347 = vld [vmem:[%s345 + $0x8] sm:$0xff]
          %348 = vrot.lane.b32.xlu0 %v346, 16
          %v349 = vpop.permute.xlu0 %348
          %v350 = vsel %vm271, %v349, %v346
          %351 = vrot.lane.b32.xlu0 %v347, 16
          %v352 = vpop.permute.xlu0 %351
          %v353 = vsel %vm271, %v352, %v347
          %354 = vrot.lane.b32.xlu0 %v350, 16
          %v355 = vpop.permute.xlu0 %354
          %356 = vrot.lane.b32.xlu0 %v353, 16
          %v357 = vpop.permute.xlu0 %356
          %v358 = vsel %vm271, %v355, %v346
          %v359 = vsel %vm271, %v357, %v347
          %362 = vrot.lane.b32.xlu0 %v358, 120
          %v363 = vpop.permute.xlu0 %362
          %364 = vrot.lane.b32.xlu0 %v359, 120
          %v365 = vpop.permute.xlu0 %364
          %368 = vst.msk [vmem:[%s345] sm:$0xff] %vm292, %v363
          %369 = vst.msk [vmem:[%s345 + $0x8] sm:$0xff] %vm292, %v365
        $region44: #{tpu_custom_call.1} parent=27 // pred_fallthru
          _
        %v370 = vlaneseq
        %v371 = vand.u32 %v370, 127
        %v372 = vld [vmem:[#allocation2] sm:$0xff]
        %v373 = vld [vmem:[#allocation2 + $0x8] sm:$0xff]
        %v374 = vld [vmem:[%s198] sm:$0xff]
        %v375 = vld [vmem:[%s198 + $0x8] sm:$0xff]
        %v376 = vmul.f32 %v374, %v372
        %v377 = vmul.f32 %v375, %v373
        %v378 = vadd.f32 %v376, 0.0
        %v379 = vadd.f32 %v377, 0.0
        %s380 = scalar_lea.vmem [#allocation2], 16
        %v381 = vld [vmem:[%s380] sm:$0xff]
        %v382 = vld [vmem:[%s380 + $0x8] sm:$0xff]
        %s383 = scalar_lea.vmem %s198, 16 [#allocation3]
        %v384 = vld [vmem:[%s383] sm:$0xff]
        %v385 = vld [vmem:[%s383 + $0x8] sm:$0xff]
        %v386 = vmul.f32 %v384, %v381
        %v387 = vmul.f32 %v385, %v382
        %v388 = vadd.f32 %v378, %v386
        %v389 = vadd.f32 %v379, %v387
        %s390 = scalar_lea.vmem [#allocation2], 32
        %v391 = vld [vmem:[%s390] sm:$0xff]
        %v392 = vld [vmem:[%s390 + $0x8] sm:$0xff]
        %s393 = scalar_lea.vmem %s198, 32 [#allocation3]
        %v394 = vld [vmem:[%s393] sm:$0xff]
        %v395 = vld [vmem:[%s393 + $0x8] sm:$0xff]
        %v396 = vmul.f32 %v394, %v391
        %v397 = vmul.f32 %v395, %v392
        %v398 = vadd.f32 %v388, %v396
        %v399 = vadd.f32 %v389, %v397
        %s400 = scalar_lea.vmem [#allocation2], 48
        %v401 = vld [vmem:[%s400] sm:$0xff]
        %v402 = vld [vmem:[%s400 + $0x8] sm:$0xff]
        %s403 = scalar_lea.vmem %s198, 48 [#allocation3]
        %v404 = vld [vmem:[%s403] sm:$0xff]
        %v405 = vld [vmem:[%s403 + $0x8] sm:$0xff]
        %v406 = vmul.f32 %v404, %v401
        %v407 = vmul.f32 %v405, %v402
        %v408 = vadd.f32 %v398, %v406
        %v409 = vadd.f32 %v399, %v407
        %v410 = vstv %s237
        %vm411 = vcmp.ge.s32.totalorder %v371, %v410
        %v412 = vsel %vm411, %v408, 0.0
        %v413 = vsel %vm411, %v409, 0.0
        %vm414 = vcmask 130048
        %415 = vst.msk [vmem:[%s232] sm:$0xff] %vm414, %v412
        %416 = vst.msk [vmem:[%s232 + $0x8] sm:$0xff] %vm414, %v413
        %v417 = vld [vmem:[#allocation2] sm:$0xff]
        %v418 = vld [vmem:[#allocation2 + $0x8] sm:$0xff]
        %vm419 = vcmask 1047680
        %420 = vrot.lane.b32.xlu0 %v417, 16
        %v421 = vpop.permute.xlu0 %420
        %v422 = vsel %vm419, %v421, %v417
        %423 = vrot.lane.b32.xlu0 %v418, 16
        %v424 = vpop.permute.xlu0 %423
        %v425 = vsel %vm419, %v424, %v418
        %426 = vrot.lane.b32.xlu0 %v422, 16
        %v427 = vpop.permute.xlu0 %426
        %428 = vrot.lane.b32.xlu0 %v425, 16
        %v429 = vpop.permute.xlu0 %428
        %v430 = vsel %vm419, %v427, %v417
        %v431 = vsel %vm419, %v429, %v418
        %v432 = vld [vmem:[%s198] sm:$0xff]
        %v433 = vld [vmem:[%s198 + $0x8] sm:$0xff]
        %436 = vrot.lane.b32.xlu0 %v430, 113
        %v437 = vpop.permute.xlu0 %436
        %438 = vrot.lane.b32.xlu0 %v431, 113
        %v439 = vpop.permute.xlu0 %438
        %v442 = vmul.f32 %v432, %v437
        %v443 = vmul.f32 %v433, %v439
        %v444 = vadd.f32 %v442, 0.0
        %v445 = vadd.f32 %v443, 0.0
        %v446 = vld [vmem:[%s380] sm:$0xff]
        %v447 = vld [vmem:[%s380 + $0x8] sm:$0xff]
        %448 = vrot.lane.b32.xlu0 %v446, 16
        %v449 = vpop.permute.xlu0 %448
        %v450 = vsel %vm419, %v449, %v446
        %451 = vrot.lane.b32.xlu0 %v447, 16
        %v452 = vpop.permute.xlu0 %451
        %v453 = vsel %vm419, %v452, %v447
        %454 = vrot.lane.b32.xlu0 %v450, 16
        %v455 = vpop.permute.xlu0 %454
        %456 = vrot.lane.b32.xlu0 %v453, 16
        %v457 = vpop.permute.xlu0 %456
        %v458 = vsel %vm419, %v455, %v446
        %v459 = vsel %vm419, %v457, %v447
        %v460 = vld [vmem:[%s383] sm:$0xff]
        %v461 = vld [vmem:[%s383 + $0x8] sm:$0xff]
        %464 = vrot.lane.b32.xlu0 %v458, 113
        %v465 = vpop.permute.xlu0 %464
        %466 = vrot.lane.b32.xlu0 %v459, 113
        %v467 = vpop.permute.xlu0 %466
        %v470 = vmul.f32 %v460, %v465
        %v471 = vmul.f32 %v461, %v467
        %v472 = vadd.f32 %v444, %v470
        %v473 = vadd.f32 %v445, %v471
        %v474 = vld [vmem:[%s390] sm:$0xff]
        %v475 = vld [vmem:[%s390 + $0x8] sm:$0xff]
        %476 = vrot.lane.b32.xlu0 %v474, 16
        %v477 = vpop.permute.xlu0 %476
        %v478 = vsel %vm419, %v477, %v474
        %479 = vrot.lane.b32.xlu0 %v475, 16
        %v480 = vpop.permute.xlu0 %479
        %v481 = vsel %vm419, %v480, %v475
        %482 = vrot.lane.b32.xlu0 %v478, 16
        %v483 = vpop.permute.xlu0 %482
        %484 = vrot.lane.b32.xlu0 %v481, 16
        %v485 = vpop.permute.xlu0 %484
        %v486 = vsel %vm419, %v483, %v474
        %v487 = vsel %vm419, %v485, %v475
        %v488 = vld [vmem:[%s393] sm:$0xff]
        %v489 = vld [vmem:[%s393 + $0x8] sm:$0xff]
        %492 = vrot.lane.b32.xlu0 %v486, 113
        %v493 = vpop.permute.xlu0 %492
        %494 = vrot.lane.b32.xlu0 %v487, 113
        %v495 = vpop.permute.xlu0 %494
        %v498 = vmul.f32 %v488, %v493
        %v499 = vmul.f32 %v489, %v495
        %v500 = vadd.f32 %v472, %v498
        %v501 = vadd.f32 %v473, %v499
        %v502 = vld [vmem:[%s400] sm:$0xff]
        %v503 = vld [vmem:[%s400 + $0x8] sm:$0xff]
        %504 = vrot.lane.b32.xlu0 %v502, 16
        %v505 = vpop.permute.xlu0 %504
        %v506 = vsel %vm419, %v505, %v502
        %507 = vrot.lane.b32.xlu0 %v503, 16
        %v508 = vpop.permute.xlu0 %507
        %v509 = vsel %vm419, %v508, %v503
        %510 = vrot.lane.b32.xlu0 %v506, 16
        %v511 = vpop.permute.xlu0 %510
        %512 = vrot.lane.b32.xlu0 %v509, 16
        %v513 = vpop.permute.xlu0 %512
        %v514 = vsel %vm419, %v511, %v502
        %v515 = vsel %vm419, %v513, %v503
        %v516 = vld [vmem:[%s403] sm:$0xff]
        %v517 = vld [vmem:[%s403 + $0x8] sm:$0xff]
        %520 = vrot.lane.b32.xlu0 %v514, 113
        %v521 = vpop.permute.xlu0 %520
        %522 = vrot.lane.b32.xlu0 %v515, 113
        %v523 = vpop.permute.xlu0 %522
        %v526 = vmul.f32 %v516, %v521
        %v527 = vmul.f32 %v517, %v523
        %v528 = vadd.f32 %v500, %v526
        %v529 = vadd.f32 %v501, %v527
        %s530 = sadd.s32 %s237, 1
        %v531 = vstv %s530
        %vm532 = vcmp.ge.s32.totalorder %v371, %v531
        %v533 = vsel %vm532, %v528, 0.0
        %v534 = vsel %vm532, %v529, 0.0
        %s535 = scalar_lea.vmem %s232, 16 [#allocation8]
        %536 = vst.msk [vmem:[%s535] sm:$0xff] %vm414, %v533
        %537 = vst.msk [vmem:[%s535 + $0x8] sm:$0xff] %vm414, %v534
        %v538 = vld [vmem:[#allocation2] sm:$0xff]
        %v539 = vld [vmem:[#allocation2 + $0x8] sm:$0xff]
        %540 = vrot.lane.b32.xlu0 %v538, 16
        %v541 = vpop.permute.xlu0 %540
        %v542 = vsel %vm419, %v541, %v538
        %543 = vrot.lane.b32.xlu0 %v539, 16
        %v544 = vpop.permute.xlu0 %543
        %v545 = vsel %vm419, %v544, %v539
        %546 = vrot.lane.b32.xlu0 %v542, 16
        %v547 = vpop.permute.xlu0 %546
        %548 = vrot.lane.b32.xlu0 %v545, 16
        %v549 = vpop.permute.xlu0 %548
        %v550 = vsel %vm419, %v547, %v538
        %v551 = vsel %vm419, %v549, %v539
        %v552 = vld [vmem:[%s198] sm:$0xff]
        %v553 = vld [vmem:[%s198 + $0x8] sm:$0xff]
        %556 = vrot.lane.b32.xlu0 %v550, 114
        %v557 = vpop.permute.xlu0 %556
        %558 = vrot.lane.b32.xlu0 %v551, 114
        %v559 = vpop.permute.xlu0 %558
        %v562 = vmul.f32 %v552, %v557
        %v563 = vmul.f32 %v553, %v559
        %v564 = vadd.f32 %v562, 0.0
        %v565 = vadd.f32 %v563, 0.0
        %v566 = vld [vmem:[%s380] sm:$0xff]
        %v567 = vld [vmem:[%s380 + $0x8] sm:$0xff]
        %568 = vrot.lane.b32.xlu0 %v566, 16
        %v569 = vpop.permute.xlu0 %568
        %v570 = vsel %vm419, %v569, %v566
        %571 = vrot.lane.b32.xlu0 %v567, 16
        %v572 = vpop.permute.xlu0 %571
        %v573 = vsel %vm419, %v572, %v567
        %574 = vrot.lane.b32.xlu0 %v570, 16
        %v575 = vpop.permute.xlu0 %574
        %576 = vrot.lane.b32.xlu0 %v573, 16
        %v577 = vpop.permute.xlu0 %576
        %v578 = vsel %vm419, %v575, %v566
        %v579 = vsel %vm419, %v577, %v567
        %v580 = vld [vmem:[%s383] sm:$0xff]
        %v581 = vld [vmem:[%s383 + $0x8] sm:$0xff]
        %584 = vrot.lane.b32.xlu0 %v578, 114
        %v585 = vpop.permute.xlu0 %584
        %586 = vrot.lane.b32.xlu0 %v579, 114
        %v587 = vpop.permute.xlu0 %586
        %v590 = vmul.f32 %v580, %v585
        %v591 = vmul.f32 %v581, %v587
        %v592 = vadd.f32 %v564, %v590
        %v593 = vadd.f32 %v565, %v591
        %v594 = vld [vmem:[%s390] sm:$0xff]
        %v595 = vld [vmem:[%s390 + $0x8] sm:$0xff]
        %596 = vrot.lane.b32.xlu0 %v594, 16
        %v597 = vpop.permute.xlu0 %596
        %v598 = vsel %vm419, %v597, %v594
        %599 = vrot.lane.b32.xlu0 %v595, 16
        %v600 = vpop.permute.xlu0 %599
        %v601 = vsel %vm419, %v600, %v595
        %602 = vrot.lane.b32.xlu0 %v598, 16
        %v603 = vpop.permute.xlu0 %602
        %604 = vrot.lane.b32.xlu0 %v601, 16
        %v605 = vpop.permute.xlu0 %604
        %v606 = vsel %vm419, %v603, %v594
        %v607 = vsel %vm419, %v605, %v595
        %v608 = vld [vmem:[%s393] sm:$0xff]
        %v609 = vld [vmem:[%s393 + $0x8] sm:$0xff]
        %612 = vrot.lane.b32.xlu0 %v606, 114
        %v613 = vpop.permute.xlu0 %612
        %614 = vrot.lane.b32.xlu0 %v607, 114
        %v615 = vpop.permute.xlu0 %614
        %v618 = vmul.f32 %v608, %v613
        %v619 = vmul.f32 %v609, %v615
        %v620 = vadd.f32 %v592, %v618
        %v621 = vadd.f32 %v593, %v619
        %v622 = vld [vmem:[%s400] sm:$0xff]
        %v623 = vld [vmem:[%s400 + $0x8] sm:$0xff]
        %624 = vrot.lane.b32.xlu0 %v622, 16
        %v625 = vpop.permute.xlu0 %624
        %v626 = vsel %vm419, %v625, %v622
        %627 = vrot.lane.b32.xlu0 %v623, 16
        %v628 = vpop.permute.xlu0 %627
        %v629 = vsel %vm419, %v628, %v623
        %630 = vrot.lane.b32.xlu0 %v626, 16
        %v631 = vpop.permute.xlu0 %630
        %632 = vrot.lane.b32.xlu0 %v629, 16
        %v633 = vpop.permute.xlu0 %632
        %v634 = vsel %vm419, %v631, %v622
        %v635 = vsel %vm419, %v633, %v623
        %v636 = vld [vmem:[%s403] sm:$0xff]
        %v637 = vld [vmem:[%s403 + $0x8] sm:$0xff]
        %640 = vrot.lane.b32.xlu0 %v634, 114
        %v641 = vpop.permute.xlu0 %640
        %642 = vrot.lane.b32.xlu0 %v635, 114
        %v643 = vpop.permute.xlu0 %642
        %v646 = vmul.f32 %v636, %v641
        %v647 = vmul.f32 %v637, %v643
        %v648 = vadd.f32 %v620, %v646
        %v649 = vadd.f32 %v621, %v647
        %s650 = sadd.s32 %s237, 2
        %v651 = vstv %s650
        %vm652 = vcmp.ge.s32.totalorder %v371, %v651
        %v653 = vsel %vm652, %v648, 0.0
        %v654 = vsel %vm652, %v649, 0.0
        %s655 = scalar_lea.vmem %s232, 32 [#allocation8]
        %656 = vst.msk [vmem:[%s655] sm:$0xff] %vm414, %v653
        %657 = vst.msk [vmem:[%s655 + $0x8] sm:$0xff] %vm414, %v654
        %v658 = vld [vmem:[#allocation2] sm:$0xff]
        %v659 = vld [vmem:[#allocation2 + $0x8] sm:$0xff]
        %660 = vrot.lane.b32.xlu0 %v658, 16
        %v661 = vpop.permute.xlu0 %660
        %v662 = vsel %vm419, %v661, %v658
        %663 = vrot.lane.b32.xlu0 %v659, 16
        %v664 = vpop.permute.xlu0 %663
        %v665 = vsel %vm419, %v664, %v659
        %666 = vrot.lane.b32.xlu0 %v662, 16
        %v667 = vpop.permute.xlu0 %666
        %668 = vrot.lane.b32.xlu0 %v665, 16
        %v669 = vpop.permute.xlu0 %668
        %v670 = vsel %vm419, %v667, %v658
        %v671 = vsel %vm419, %v669, %v659
        %v672 = vld [vmem:[%s198] sm:$0xff]
        %v673 = vld [vmem:[%s198 + $0x8] sm:$0xff]
        %676 = vrot.lane.b32.xlu0 %v670, 115
        %v677 = vpop.permute.xlu0 %676
        %678 = vrot.lane.b32.xlu0 %v671, 115
        %v679 = vpop.permute.xlu0 %678
        %v682 = vmul.f32 %v672, %v677
        %v683 = vmul.f32 %v673, %v679
        %v684 = vadd.f32 %v682, 0.0
        %v685 = vadd.f32 %v683, 0.0
        %v686 = vld [vmem:[%s380] sm:$0xff]
        %v687 = vld [vmem:[%s380 + $0x8] sm:$0xff]
        %688 = vrot.lane.b32.xlu0 %v686, 16
        %v689 = vpop.permute.xlu0 %688
        %v690 = vsel %vm419, %v689, %v686
        %691 = vrot.lane.b32.xlu0 %v687, 16
        %v692 = vpop.permute.xlu0 %691
        %v693 = vsel %vm419, %v692, %v687
        %694 = vrot.lane.b32.xlu0 %v690, 16
        %v695 = vpop.permute.xlu0 %694
        %696 = vrot.lane.b32.xlu0 %v693, 16
        %v697 = vpop.permute.xlu0 %696
        %v698 = vsel %vm419, %v695, %v686
        %v699 = vsel %vm419, %v697, %v687
        %v700 = vld [vmem:[%s383] sm:$0xff]
        %v701 = vld [vmem:[%s383 + $0x8] sm:$0xff]
        %704 = vrot.lane.b32.xlu0 %v698, 115
        %v705 = vpop.permute.xlu0 %704
        %706 = vrot.lane.b32.xlu0 %v699, 115
        %v707 = vpop.permute.xlu0 %706
        %v710 = vmul.f32 %v700, %v705
        %v711 = vmul.f32 %v701, %v707
        %v712 = vadd.f32 %v684, %v710
        %v713 = vadd.f32 %v685, %v711
        %v714 = vld [vmem:[%s390] sm:$0xff]
        %v715 = vld [vmem:[%s390 + $0x8] sm:$0xff]
        %716 = vrot.lane.b32.xlu0 %v714, 16
        %v717 = vpop.permute.xlu0 %716
        %v718 = vsel %vm419, %v717, %v714
        %719 = vrot.lane.b32.xlu0 %v715, 16
        %v720 = vpop.permute.xlu0 %719
        %v721 = vsel %vm419, %v720, %v715
        %722 = vrot.lane.b32.xlu0 %v718, 16
        %v723 = vpop.permute.xlu0 %722
        %724 = vrot.lane.b32.xlu0 %v721, 16
        %v725 = vpop.permute.xlu0 %724
        %v726 = vsel %vm419, %v723, %v714
        %v727 = vsel %vm419, %v725, %v715
        %v728 = vld [vmem:[%s393] sm:$0xff]
        %v729 = vld [vmem:[%s393 + $0x8] sm:$0xff]
        %732 = vrot.lane.b32.xlu0 %v726, 115
        %v733 = vpop.permute.xlu0 %732
        %734 = vrot.lane.b32.xlu0 %v727, 115
        %v735 = vpop.permute.xlu0 %734
        %v738 = vmul.f32 %v728, %v733
        %v739 = vmul.f32 %v729, %v735
        %v740 = vadd.f32 %v712, %v738
        %v741 = vadd.f32 %v713, %v739
        %v742 = vld [vmem:[%s400] sm:$0xff]
        %v743 = vld [vmem:[%s400 + $0x8] sm:$0xff]
        %744 = vrot.lane.b32.xlu0 %v742, 16
        %v745 = vpop.permute.xlu0 %744
        %v746 = vsel %vm419, %v745, %v742
        %747 = vrot.lane.b32.xlu0 %v743, 16
        %v748 = vpop.permute.xlu0 %747
        %v749 = vsel %vm419, %v748, %v743
        %750 = vrot.lane.b32.xlu0 %v746, 16
        %v751 = vpop.permute.xlu0 %750
        %752 = vrot.lane.b32.xlu0 %v749, 16
        %v753 = vpop.permute.xlu0 %752
        %v754 = vsel %vm419, %v751, %v742
        %v755 = vsel %vm419, %v753, %v743
        %v756 = vld [vmem:[%s403] sm:$0xff]
        %v757 = vld [vmem:[%s403 + $0x8] sm:$0xff]
        %760 = vrot.lane.b32.xlu0 %v754, 115
        %v761 = vpop.permute.xlu0 %760
        %762 = vrot.lane.b32.xlu0 %v755, 115
        %v763 = vpop.permute.xlu0 %762
        %v766 = vmul.f32 %v756, %v761
        %v767 = vmul.f32 %v757, %v763
        %v768 = vadd.f32 %v740, %v766
        %v769 = vadd.f32 %v741, %v767
        %s770 = sadd.s32 %s237, 3
        %v771 = vstv %s770
        %vm772 = vcmp.ge.s32.totalorder %v371, %v771
        %v773 = vsel %vm772, %v768, 0.0
        %v774 = vsel %vm772, %v769, 0.0
        %s775 = scalar_lea.vmem %s232, 48 [#allocation8]
        %776 = vst.msk [vmem:[%s775] sm:$0xff] %vm414, %v773
        %777 = vst.msk [vmem:[%s775 + $0x8] sm:$0xff] %vm414, %v774
        %v778 = vld [vmem:[#allocation2] sm:$0xff]
        %v779 = vld [vmem:[#allocation2 + $0x8] sm:$0xff]
        %780 = vrot.lane.b32.xlu0 %v778, 16
        %v781 = vpop.permute.xlu0 %780
        %v782 = vsel %vm419, %v781, %v778
        %783 = vrot.lane.b32.xlu0 %v779, 16
        %v784 = vpop.permute.xlu0 %783
        %v785 = vsel %vm419, %v784, %v779
        %786 = vrot.lane.b32.xlu0 %v782, 16
        %v787 = vpop.permute.xlu0 %786
        %788 = vrot.lane.b32.xlu0 %v785, 16
        %v789 = vpop.permute.xlu0 %788
        %v790 = vsel %vm419, %v787, %v778
        %v791 = vsel %vm419, %v789, %v779
        %v792 = vld [vmem:[%s198] sm:$0xff]
        %v793 = vld [vmem:[%s198 + $0x8] sm:$0xff]
        %796 = vrot.lane.b32.xlu0 %v790, 116
        %v797 = vpop.permute.xlu0 %796
        %798 = vrot.lane.b32.xlu0 %v791, 116
        %v799 = vpop.permute.xlu0 %798
        %v802 = vmul.f32 %v792, %v797
        %v803 = vmul.f32 %v793, %v799
        %v804 = vadd.f32 %v802, 0.0
        %v805 = vadd.f32 %v803, 0.0
        %v806 = vld [vmem:[%s380] sm:$0xff]
        %v807 = vld [vmem:[%s380 + $0x8] sm:$0xff]
        %808 = vrot.lane.b32.xlu0 %v806, 16
        %v809 = vpop.permute.xlu0 %808
        %v810 = vsel %vm419, %v809, %v806
        %811 = vrot.lane.b32.xlu0 %v807, 16
        %v812 = vpop.permute.xlu0 %811
        %v813 = vsel %vm419, %v812, %v807
        %814 = vrot.lane.b32.xlu0 %v810, 16
        %v815 = vpop.permute.xlu0 %814
        %816 = vrot.lane.b32.xlu0 %v813, 16
        %v817 = vpop.permute.xlu0 %816
        %v818 = vsel %vm419, %v815, %v806
        %v819 = vsel %vm419, %v817, %v807
        %v820 = vld [vmem:[%s383] sm:$0xff]
        %v821 = vld [vmem:[%s383 + $0x8] sm:$0xff]
        %824 = vrot.lane.b32.xlu0 %v818, 116
        %v825 = vpop.permute.xlu0 %824
        %826 = vrot.lane.b32.xlu0 %v819, 116
        %v827 = vpop.permute.xlu0 %826
        %v830 = vmul.f32 %v820, %v825
        %v831 = vmul.f32 %v821, %v827
        %v832 = vadd.f32 %v804, %v830
        %v833 = vadd.f32 %v805, %v831
        %v834 = vld [vmem:[%s390] sm:$0xff]
        %v835 = vld [vmem:[%s390 + $0x8] sm:$0xff]
        %836 = vrot.lane.b32.xlu0 %v834, 16
        %v837 = vpop.permute.xlu0 %836
        %v838 = vsel %vm419, %v837, %v834
        %839 = vrot.lane.b32.xlu0 %v835, 16
        %v840 = vpop.permute.xlu0 %839
        %v841 = vsel %vm419, %v840, %v835
        %842 = vrot.lane.b32.xlu0 %v838, 16
        %v843 = vpop.permute.xlu0 %842
        %844 = vrot.lane.b32.xlu0 %v841, 16
        %v845 = vpop.permute.xlu0 %844
        %v846 = vsel %vm419, %v843, %v834
        %v847 = vsel %vm419, %v845, %v835
        %v848 = vld [vmem:[%s393] sm:$0xff]
        %v849 = vld [vmem:[%s393 + $0x8] sm:$0xff]
        %852 = vrot.lane.b32.xlu0 %v846, 116
        %v853 = vpop.permute.xlu0 %852
        %854 = vrot.lane.b32.xlu0 %v847, 116
        %v855 = vpop.permute.xlu0 %854
        %v858 = vmul.f32 %v848, %v853
        %v859 = vmul.f32 %v849, %v855
        %v860 = vadd.f32 %v832, %v858
        %v861 = vadd.f32 %v833, %v859
        %v862 = vld [vmem:[%s400] sm:$0xff]
        %v863 = vld [vmem:[%s400 + $0x8] sm:$0xff]
        %864 = vrot.lane.b32.xlu0 %v862, 16
        %v865 = vpop.permute.xlu0 %864
        %v866 = vsel %vm419, %v865, %v862
        %867 = vrot.lane.b32.xlu0 %v863, 16
        %v868 = vpop.permute.xlu0 %867
        %v869 = vsel %vm419, %v868, %v863
        %870 = vrot.lane.b32.xlu0 %v866, 16
        %v871 = vpop.permute.xlu0 %870
        %872 = vrot.lane.b32.xlu0 %v869, 16
        %v873 = vpop.permute.xlu0 %872
        %v874 = vsel %vm419, %v871, %v862
        %v875 = vsel %vm419, %v873, %v863
        %v876 = vld [vmem:[%s403] sm:$0xff]
        %v877 = vld [vmem:[%s403 + $0x8] sm:$0xff]
        %880 = vrot.lane.b32.xlu0 %v874, 116
        %v881 = vpop.permute.xlu0 %880
        %882 = vrot.lane.b32.xlu0 %v875, 116
        %v883 = vpop.permute.xlu0 %882
        %v886 = vmul.f32 %v876, %v881
        %v887 = vmul.f32 %v877, %v883
        %v888 = vadd.f32 %v860, %v886
        %v889 = vadd.f32 %v861, %v887
        %s890 = sadd.s32 %s237, 4
        %v891 = vstv %s890
        %vm892 = vcmp.ge.s32.totalorder %v371, %v891
        %v893 = vsel %vm892, %v888, 0.0
        %v894 = vsel %vm892, %v889, 0.0
        %s895 = scalar_lea.vmem %s232, 64 [#allocation8]
        %896 = vst.msk [vmem:[%s895] sm:$0xff] %vm414, %v893
        %897 = vst.msk [vmem:[%s895 + $0x8] sm:$0xff] %vm414, %v894
        %v898 = vld [vmem:[#allocation2] sm:$0xff]
        %v899 = vld [vmem:[#allocation2 + $0x8] sm:$0xff]
        %900 = vrot.lane.b32.xlu0 %v898, 16
        %v901 = vpop.permute.xlu0 %900
        %v902 = vsel %vm419, %v901, %v898
        %903 = vrot.lane.b32.xlu0 %v899, 16
        %v904 = vpop.permute.xlu0 %903
        %v905 = vsel %vm419, %v904, %v899
        %906 = vrot.lane.b32.xlu0 %v902, 16
        %v907 = vpop.permute.xlu0 %906
        %908 = vrot.lane.b32.xlu0 %v905, 16
        %v909 = vpop.permute.xlu0 %908
        %v910 = vsel %vm419, %v907, %v898
        %v911 = vsel %vm419, %v909, %v899
        %v912 = vld [vmem:[%s198] sm:$0xff]
        %v913 = vld [vmem:[%s198 + $0x8] sm:$0xff]
        %916 = vrot.lane.b32.xlu0 %v910, 117
        %v917 = vpop.permute.xlu0 %916
        %918 = vrot.lane.b32.xlu0 %v911, 117
        %v919 = vpop.permute.xlu0 %918
        %v922 = vmul.f32 %v912, %v917
        %v923 = vmul.f32 %v913, %v919
        %v924 = vadd.f32 %v922, 0.0
        %v925 = vadd.f32 %v923, 0.0
        %v926 = vld [vmem:[%s380] sm:$0xff]
        %v927 = vld [vmem:[%s380 + $0x8] sm:$0xff]
        %928 = vrot.lane.b32.xlu0 %v926, 16
        %v929 = vpop.permute.xlu0 %928
        %v930 = vsel %vm419, %v929, %v926
        %931 = vrot.lane.b32.xlu0 %v927, 16
        %v932 = vpop.permute.xlu0 %931
        %v933 = vsel %vm419, %v932, %v927
        %934 = vrot.lane.b32.xlu0 %v930, 16
        %v935 = vpop.permute.xlu0 %934
        %936 = vrot.lane.b32.xlu0 %v933, 16
        %v937 = vpop.permute.xlu0 %936
        %v938 = vsel %vm419, %v935, %v926
        %v939 = vsel %vm419, %v937, %v927
        %v940 = vld [vmem:[%s383] sm:$0xff]
        %v941 = vld [vmem:[%s383 + $0x8] sm:$0xff]
        %944 = vrot.lane.b32.xlu0 %v938, 117
        %v945 = vpop.permute.xlu0 %944
        %946 = vrot.lane.b32.xlu0 %v939, 117
        %v947 = vpop.permute.xlu0 %946
        %v950 = vmul.f32 %v940, %v945
        %v951 = vmul.f32 %v941, %v947
        %v952 = vadd.f32 %v924, %v950
        %v953 = vadd.f32 %v925, %v951
        %v954 = vld [vmem:[%s390] sm:$0xff]
        %v955 = vld [vmem:[%s390 + $0x8] sm:$0xff]
        %956 = vrot.lane.b32.xlu0 %v954, 16
        %v957 = vpop.permute.xlu0 %956
        %v958 = vsel %vm419, %v957, %v954
        %959 = vrot.lane.b32.xlu0 %v955, 16
        %v960 = vpop.permute.xlu0 %959
        %v961 = vsel %vm419, %v960, %v955
        %962 = vrot.lane.b32.xlu0 %v958, 16
        %v963 = vpop.permute.xlu0 %962
        %964 = vrot.lane.b32.xlu0 %v961, 16
        %v965 = vpop.permute.xlu0 %964
        %v966 = vsel %vm419, %v963, %v954
        %v967 = vsel %vm419, %v965, %v955
        %v968 = vld [vmem:[%s393] sm:$0xff]
        %v969 = vld [vmem:[%s393 + $0x8] sm:$0xff]
        %972 = vrot.lane.b32.xlu0 %v966, 117
        %v973 = vpop.permute.xlu0 %972
        %974 = vrot.lane.b32.xlu0 %v967, 117
        %v975 = vpop.permute.xlu0 %974
        %v978 = vmul.f32 %v968, %v973
        %v979 = vmul.f32 %v969, %v975
        %v980 = vadd.f32 %v952, %v978
        %v981 = vadd.f32 %v953, %v979
        %v982 = vld [vmem:[%s400] sm:$0xff]
        %v983 = vld [vmem:[%s400 + $0x8] sm:$0xff]
        %984 = vrot.lane.b32.xlu0 %v982, 16
        %v985 = vpop.permute.xlu0 %984
        %v986 = vsel %vm419, %v985, %v982
        %987 = vrot.lane.b32.xlu0 %v983, 16
        %v988 = vpop.permute.xlu0 %987
        %v989 = vsel %vm419, %v988, %v983
        %990 = vrot.lane.b32.xlu0 %v986, 16
        %v991 = vpop.permute.xlu0 %990
        %992 = vrot.lane.b32.xlu0 %v989, 16
        %v993 = vpop.permute.xlu0 %992
        %v994 = vsel %vm419, %v991, %v982
        %v995 = vsel %vm419, %v993, %v983
        %v996 = vld [vmem:[%s403] sm:$0xff]
        %v997 = vld [vmem:[%s403 + $0x8] sm:$0xff]
        %1000 = vrot.lane.b32.xlu0 %v994, 117
        %v1001 = vpop.permute.xlu0 %1000
        %1002 = vrot.lane.b32.xlu0 %v995, 117
        %v1003 = vpop.permute.xlu0 %1002
        %v1006 = vmul.f32 %v996, %v1001
        %v1007 = vmul.f32 %v997, %v1003
        %v1008 = vadd.f32 %v980, %v1006
        %v1009 = vadd.f32 %v981, %v1007
        %s1010 = sadd.s32 %s237, 5
        %v1011 = vstv %s1010
        %vm1012 = vcmp.ge.s32.totalorder %v371, %v1011
        %v1013 = vsel %vm1012, %v1008, 0.0
        %v1014 = vsel %vm1012, %v1009, 0.0
        %s1015 = scalar_lea.vmem %s232, 80 [#allocation8]
        %1016 = vst.msk [vmem:[%s1015] sm:$0xff] %vm414, %v1013
        %1017 = vst.msk [vmem:[%s1015 + $0x8] sm:$0xff] %vm414, %v1014
        %v1018 = vld [vmem:[#allocation2] sm:$0xff]
        %v1019 = vld [vmem:[#allocation2 + $0x8] sm:$0xff]
        %1020 = vrot.lane.b32.xlu0 %v1018, 16
        %v1021 = vpop.permute.xlu0 %1020
        %v1022 = vsel %vm419, %v1021, %v1018
        %1023 = vrot.lane.b32.xlu0 %v1019, 16
        %v1024 = vpop.permute.xlu0 %1023
        %v1025 = vsel %vm419, %v1024, %v1019
        %1026 = vrot.lane.b32.xlu0 %v1022, 16
        %v1027 = vpop.permute.xlu0 %1026
        %1028 = vrot.lane.b32.xlu0 %v1025, 16
        %v1029 = vpop.permute.xlu0 %1028
        %v1030 = vsel %vm419, %v1027, %v1018
        %v1031 = vsel %vm419, %v1029, %v1019
        %v1032 = vld [vmem:[%s198] sm:$0xff]
        %v1033 = vld [vmem:[%s198 + $0x8] sm:$0xff]
        %1036 = vrot.lane.b32.xlu0 %v1030, 118
        %v1037 = vpop.permute.xlu0 %1036
        %1038 = vrot.lane.b32.xlu0 %v1031, 118
        %v1039 = vpop.permute.xlu0 %1038
        %v1042 = vmul.f32 %v1032, %v1037
        %v1043 = vmul.f32 %v1033, %v1039
        %v1044 = vadd.f32 %v1042, 0.0
        %v1045 = vadd.f32 %v1043, 0.0
        %v1046 = vld [vmem:[%s380] sm:$0xff]
        %v1047 = vld [vmem:[%s380 + $0x8] sm:$0xff]
        %1048 = vrot.lane.b32.xlu0 %v1046, 16
        %v1049 = vpop.permute.xlu0 %1048
        %v1050 = vsel %vm419, %v1049, %v1046
        %1051 = vrot.lane.b32.xlu0 %v1047, 16
        %v1052 = vpop.permute.xlu0 %1051
        %v1053 = vsel %vm419, %v1052, %v1047
        %1054 = vrot.lane.b32.xlu0 %v1050, 16
        %v1055 = vpop.permute.xlu0 %1054
        %1056 = vrot.lane.b32.xlu0 %v1053, 16
        %v1057 = vpop.permute.xlu0 %1056
        %v1058 = vsel %vm419, %v1055, %v1046
        %v1059 = vsel %vm419, %v1057, %v1047
        %v1060 = vld [vmem:[%s383] sm:$0xff]
        %v1061 = vld [vmem:[%s383 + $0x8] sm:$0xff]
        %1064 = vrot.lane.b32.xlu0 %v1058, 118
        %v1065 = vpop.permute.xlu0 %1064
        %1066 = vrot.lane.b32.xlu0 %v1059, 118
        %v1067 = vpop.permute.xlu0 %1066
        %v1070 = vmul.f32 %v1060, %v1065
        %v1071 = vmul.f32 %v1061, %v1067
        %v1072 = vadd.f32 %v1044, %v1070
        %v1073 = vadd.f32 %v1045, %v1071
        %v1074 = vld [vmem:[%s390] sm:$0xff]
        %v1075 = vld [vmem:[%s390 + $0x8] sm:$0xff]
        %1076 = vrot.lane.b32.xlu0 %v1074, 16
        %v1077 = vpop.permute.xlu0 %1076
        %v1078 = vsel %vm419, %v1077, %v1074
        %1079 = vrot.lane.b32.xlu0 %v1075, 16
        %v1080 = vpop.permute.xlu0 %1079
        %v1081 = vsel %vm419, %v1080, %v1075
        %1082 = vrot.lane.b32.xlu0 %v1078, 16
        %v1083 = vpop.permute.xlu0 %1082
        %1084 = vrot.lane.b32.xlu0 %v1081, 16
        %v1085 = vpop.permute.xlu0 %1084
        %v1086 = vsel %vm419, %v1083, %v1074
        %v1087 = vsel %vm419, %v1085, %v1075
        %v1088 = vld [vmem:[%s393] sm:$0xff]
        %v1089 = vld [vmem:[%s393 + $0x8] sm:$0xff]
        %1092 = vrot.lane.b32.xlu0 %v1086, 118
        %v1093 = vpop.permute.xlu0 %1092
        %1094 = vrot.lane.b32.xlu0 %v1087, 118
        %v1095 = vpop.permute.xlu0 %1094
        %v1098 = vmul.f32 %v1088, %v1093
        %v1099 = vmul.f32 %v1089, %v1095
        %v1100 = vadd.f32 %v1072, %v1098
        %v1101 = vadd.f32 %v1073, %v1099
        %v1102 = vld [vmem:[%s400] sm:$0xff]
        %v1103 = vld [vmem:[%s400 + $0x8] sm:$0xff]
        %1104 = vrot.lane.b32.xlu0 %v1102, 16
        %v1105 = vpop.permute.xlu0 %1104
        %v1106 = vsel %vm419, %v1105, %v1102
        %1107 = vrot.lane.b32.xlu0 %v1103, 16
        %v1108 = vpop.permute.xlu0 %1107
        %v1109 = vsel %vm419, %v1108, %v1103
        %1110 = vrot.lane.b32.xlu0 %v1106, 16
        %v1111 = vpop.permute.xlu0 %1110
        %1112 = vrot.lane.b32.xlu0 %v1109, 16
        %v1113 = vpop.permute.xlu0 %1112
        %v1114 = vsel %vm419, %v1111, %v1102
        %v1115 = vsel %vm419, %v1113, %v1103
        %v1116 = vld [vmem:[%s403] sm:$0xff]
        %v1117 = vld [vmem:[%s403 + $0x8] sm:$0xff]
        %1120 = vrot.lane.b32.xlu0 %v1114, 118
        %v1121 = vpop.permute.xlu0 %1120
        %1122 = vrot.lane.b32.xlu0 %v1115, 118
        %v1123 = vpop.permute.xlu0 %1122
        %v1126 = vmul.f32 %v1116, %v1121
        %v1127 = vmul.f32 %v1117, %v1123
        %v1128 = vadd.f32 %v1100, %v1126
        %v1129 = vadd.f32 %v1101, %v1127
        %s1130 = sadd.s32 %s237, 6
        %v1131 = vstv %s1130
        %vm1132 = vcmp.ge.s32.totalorder %v371, %v1131
        %v1133 = vsel %vm1132, %v1128, 0.0
        %v1134 = vsel %vm1132, %v1129, 0.0
        %s1135 = scalar_lea.vmem %s232, 96 [#allocation8]
        %1136 = vst.msk [vmem:[%s1135] sm:$0xff] %vm414, %v1133
        %1137 = vst.msk [vmem:[%s1135 + $0x8] sm:$0xff] %vm414, %v1134
        %v1138 = vld [vmem:[#allocation2] sm:$0xff]
        %v1139 = vld [vmem:[#allocation2 + $0x8] sm:$0xff]
        %1140 = vrot.lane.b32.xlu0 %v1138, 16
        %v1141 = vpop.permute.xlu0 %1140
        %v1142 = vsel %vm419, %v1141, %v1138
        %1143 = vrot.lane.b32.xlu0 %v1139, 16
        %v1144 = vpop.permute.xlu0 %1143
        %v1145 = vsel %vm419, %v1144, %v1139
        %1146 = vrot.lane.b32.xlu0 %v1142, 16
        %v1147 = vpop.permute.xlu0 %1146
        %1148 = vrot.lane.b32.xlu0 %v1145, 16
        %v1149 = vpop.permute.xlu0 %1148
        %v1150 = vsel %vm419, %v1147, %v1138
        %v1151 = vsel %vm419, %v1149, %v1139
        %v1152 = vld [vmem:[%s198] sm:$0xff]
        %v1153 = vld [vmem:[%s198 + $0x8] sm:$0xff]
        %1156 = vrot.lane.b32.xlu0 %v1150, 119
        %v1157 = vpop.permute.xlu0 %1156
        %1158 = vrot.lane.b32.xlu0 %v1151, 119
        %v1159 = vpop.permute.xlu0 %1158
        %v1162 = vmul.f32 %v1152, %v1157
        %v1163 = vmul.f32 %v1153, %v1159
        %v1164 = vadd.f32 %v1162, 0.0
        %v1165 = vadd.f32 %v1163, 0.0
        %v1166 = vld [vmem:[%s380] sm:$0xff]
        %v1167 = vld [vmem:[%s380 + $0x8] sm:$0xff]
        %1168 = vrot.lane.b32.xlu0 %v1166, 16
        %v1169 = vpop.permute.xlu0 %1168
        %v1170 = vsel %vm419, %v1169, %v1166
        %1171 = vrot.lane.b32.xlu0 %v1167, 16
        %v1172 = vpop.permute.xlu0 %1171
        %v1173 = vsel %vm419, %v1172, %v1167
        %1174 = vrot.lane.b32.xlu0 %v1170, 16
        %v1175 = vpop.permute.xlu0 %1174
        %1176 = vrot.lane.b32.xlu0 %v1173, 16
        %v1177 = vpop.permute.xlu0 %1176
        %v1178 = vsel %vm419, %v1175, %v1166
        %v1179 = vsel %vm419, %v1177, %v1167
        %v1180 = vld [vmem:[%s383] sm:$0xff]
        %v1181 = vld [vmem:[%s383 + $0x8] sm:$0xff]
        %1184 = vrot.lane.b32.xlu0 %v1178, 119
        %v1185 = vpop.permute.xlu0 %1184
        %1186 = vrot.lane.b32.xlu0 %v1179, 119
        %v1187 = vpop.permute.xlu0 %1186
        %v1190 = vmul.f32 %v1180, %v1185
        %v1191 = vmul.f32 %v1181, %v1187
        %v1192 = vadd.f32 %v1164, %v1190
        %v1193 = vadd.f32 %v1165, %v1191
        %v1194 = vld [vmem:[%s390] sm:$0xff]
        %v1195 = vld [vmem:[%s390 + $0x8] sm:$0xff]
        %1196 = vrot.lane.b32.xlu0 %v1194, 16
        %v1197 = vpop.permute.xlu0 %1196
        %v1198 = vsel %vm419, %v1197, %v1194
        %1199 = vrot.lane.b32.xlu0 %v1195, 16
        %v1200 = vpop.permute.xlu0 %1199
        %v1201 = vsel %vm419, %v1200, %v1195
        %1202 = vrot.lane.b32.xlu0 %v1198, 16
        %v1203 = vpop.permute.xlu0 %1202
        %1204 = vrot.lane.b32.xlu0 %v1201, 16
        %v1205 = vpop.permute.xlu0 %1204
        %v1206 = vsel %vm419, %v1203, %v1194
        %v1207 = vsel %vm419, %v1205, %v1195
        %v1208 = vld [vmem:[%s393] sm:$0xff]
        %v1209 = vld [vmem:[%s393 + $0x8] sm:$0xff]
        %1212 = vrot.lane.b32.xlu0 %v1206, 119
        %v1213 = vpop.permute.xlu0 %1212
        %1214 = vrot.lane.b32.xlu0 %v1207, 119
        %v1215 = vpop.permute.xlu0 %1214
        %v1218 = vmul.f32 %v1208, %v1213
        %v1219 = vmul.f32 %v1209, %v1215
        %v1220 = vadd.f32 %v1192, %v1218
        %v1221 = vadd.f32 %v1193, %v1219
        %v1222 = vld [vmem:[%s400] sm:$0xff]
        %v1223 = vld [vmem:[%s400 + $0x8] sm:$0xff]
        %1224 = vrot.lane.b32.xlu0 %v1222, 16
        %v1225 = vpop.permute.xlu0 %1224
        %v1226 = vsel %vm419, %v1225, %v1222
        %1227 = vrot.lane.b32.xlu0 %v1223, 16
        %v1228 = vpop.permute.xlu0 %1227
        %v1229 = vsel %vm419, %v1228, %v1223
        %1230 = vrot.lane.b32.xlu0 %v1226, 16
        %v1231 = vpop.permute.xlu0 %1230
        %1232 = vrot.lane.b32.xlu0 %v1229, 16
        %v1233 = vpop.permute.xlu0 %1232
        %v1234 = vsel %vm419, %v1231, %v1222
        %v1235 = vsel %vm419, %v1233, %v1223
        %v1236 = vld [vmem:[%s403] sm:$0xff]
        %v1237 = vld [vmem:[%s403 + $0x8] sm:$0xff]
        %1240 = vrot.lane.b32.xlu0 %v1234, 119
        %v1241 = vpop.permute.xlu0 %1240
        %1242 = vrot.lane.b32.xlu0 %v1235, 119
        %v1243 = vpop.permute.xlu0 %1242
        %v1246 = vmul.f32 %v1236, %v1241
        %v1247 = vmul.f32 %v1237, %v1243
        %v1248 = vadd.f32 %v1220, %v1246
        %v1249 = vadd.f32 %v1221, %v1247
        %s1250 = sadd.s32 %s237, 7
        %v1251 = vstv %s1250
        %vm1252 = vcmp.ge.s32.totalorder %v371, %v1251
        %v1253 = vsel %vm1252, %v1248, 0.0
        %v1254 = vsel %vm1252, %v1249, 0.0
        %s1255 = scalar_lea.vmem %s232, 112 [#allocation8]
        %1256 = vst.msk [vmem:[%s1255] sm:$0xff] %vm414, %v1253
        %1257 = vst.msk [vmem:[%s1255 + $0x8] sm:$0xff] %vm414, %v1254
        %s1258 = sand.u32 %s109, 1
        %s1259 = scalar_lea.sflag [#allocation5], %s1258
        %s1260 = sand.u32 %s109, 1
        %s1261 = smul.addr %s1260, 128
        %s1262 = scalar_lea.vmem [#allocation8], %s1261
        // Predicated region
        $region45: #{tpu_custom_call.1} parent=27 // pred_check
          %p1263 = pneg %p119
        $region46: #{tpu_custom_call.1} parent=27 // pred_check_branch
          %1265 = sbr.rel (%p1263) target = $region48
        $region47: #{tpu_custom_call.1} parent=27 // pred_region
          %s1266 = smul.u32 8, %s29
          %s1267 = smul.u32 2, %s28
          %s1269 = ssub.s32 2048, 2048
          %1270 = vsyncadd %s1259, %s1269
          %s1271 = smul.addr %s1266, 2
          %s1272 = sadd.s32 %s1267, %s1271
          %s1273 = smul.addr %s27, 16
          %s1274 = sadd.s32 %s1272, %s1273
          %s1275 = smul.addr %s1274, 128
          %s1276 = scalar_lea.hbm %s2, %s1275
          %s1277 = sshll.u32 %s1262, 4
          %s1278 = int_to_ptr.vmem [resolvable:$true] %s1277
          %1283 = dma.vmem_to_hbm [thread:$0]  %s1278, 2048, %s1276, %s1259, 128, 128, 8
        $region48: #{tpu_custom_call.1} parent=27 // pred_fallthru
          _
      $region28: #{tpu_custom_call.1} parent=5 // pred_fallthru
        _
      %p1284 = scmp.le.s32.totalorder 2, %s17
      // Predicated region
      $region49: #{tpu_custom_call.1} parent=5 // pred_check
        %p1285 = pneg %p1284
      $region50: #{tpu_custom_call.1} parent=5 // pred_check_branch
        %1287 = sbr.rel (%p1285) target = $region52
      $region51: #{tpu_custom_call.1} parent=5 // pred_region
        %s1288 = ssub.s32 %s17, 2
        // Predicated region
        $region53: #{tpu_custom_call.1} parent=51 // pred_check
          %p1289 = pneg %p125
        $region54: #{tpu_custom_call.1} parent=51 // pred_check_branch
          %1291 = sbr.rel (%p1289) target = $region56
        $region55: #{tpu_custom_call.1} parent=51 // pred_region
          %s1292 = sand.u32 %s110, 1
          %s1293 = scalar_lea.sflag [#allocation5], %s1292
          %s1294 = sand.u32 %s110, 1
          %s1295 = smul.addr %s1294, 128
          %s1296 = scalar_lea.vmem [#allocation8], %s1295
          %1297 = dma.done %s1293, 2048
        $region56: #{tpu_custom_call.1} parent=51 // pred_fallthru
          _
      $region52: #{tpu_custom_call.1} parent=5 // pred_fallthru
        _
    $region6: #{tpu_custom_call.1} parent=1 // loop_footer
      %s21 = sadd.s32 1, %s17
    $region7: #{tpu_custom_call.1} parent=1 // loop_footer_branch
      %16 = sbr.rel target = $region3
    $region8: #{tpu_custom_call.1} parent=1 // loop_exit
      _
    %1298 = vsyncpa [#allocation4], 1
    %s1299 = scalar_lea.sflag [#allocation4], 1
    %1300 = vsyncpa %s1299, 1
    %1301 = vsyncpa [#allocation7], 1
    %s1302 = scalar_lea.sflag [#allocation7], 1
    %1303 = vsyncpa %s1302, 1
    %1304 = vsyncpa [#allocation5], 1
    %s1305 = scalar_lea.sflag [#allocation5], 1
    %1306 = vsyncpa %s1305, 1

</llo_original>
